<compile_context>
chip_gen: v7x
topology: tpu7x:2x2x1
jax: 0.10.0
libtpu: 0.0.40
codegen_flags: <defaults>
</compile_context>

<pallas_src>
import functools

import jax
import jax.numpy as jnp
from jax import lax
from jax.experimental import pallas as pl
from jax.experimental.pallas import tpu as pltpu


def _round_up(x: int, m: int) -> int:
    return ((x + m - 1) // m) * m


def edge_linear_kernel(x_ref, w_ref, b_ref, o_ref):
    """One edge tile: fused [te, K] @ [K, C] MXU matmul + f32 bias, store bf16."""
    acc = jnp.dot(x_ref[...], w_ref[...], preferred_element_type=jnp.float32)
    o_ref[...] = (acc + b_ref[...]).astype(o_ref.dtype)


@functools.partial(jax.jit, static_argnames=("te_max", "use_bf16"))
def mlp_edge_scores(src, dst, e_feat, u_feat, v_feat, W, b, *, te_max=2048,
                    use_bf16=True):
    """JAX/Pallas equivalent of MLP.forward(g, e_feat, u_feat, v_feat).

    src, dst : int32[E]      endpoint indices of the 'forward' edges
    e_feat   : f32[E,  Fe]   edge features
    u_feat   : f32[Nu, Fu]   source-type node features
    v_feat   : f32[Nv, Fv]   destination-type node features
    W        : f32[Fe+Fu+Fv, C]  linear weight, already transposed (torch W.T)
    b        : f32[C]        linear bias
    returns  : f32[E, C]     per-edge scores
    """
    E = e_feat.shape[0]
    in_dim, C = W.shape
    assert e_feat.shape[1] + u_feat.shape[1] + v_feat.shape[1] == in_dim

    mm_dtype = jnp.bfloat16 if use_bf16 else jnp.float32
    out_slab_dtype = jnp.bfloat16 if use_bf16 else jnp.float32
    mm_itemsize = jnp.dtype(mm_dtype).itemsize
    out_itemsize = jnp.dtype(out_slab_dtype).itemsize

    # --- tile / padding geometry (all static: derived from shapes) ----------
    te = max(int(te_max), 256)
    # Halve the edge tile until the grid has >= 2 tiles, so both v7x
    # TensorCores get work on the "parallel" edge axis (harmless on v5e/v6e).
    while te > 256 and _round_up(max(E, 1), te) // te < 2:
        te //= 2
    te = max(_round_up(te, 8), 256)
    e_pad = _round_up(max(E, 1), te)
    k_pad = _round_up(in_dim, 128)   # lane-dense; do NOT pad to 256 (HBM-bound)
    c_pad = _round_up(C, 128)

    # --- gather + build the padded bf16 activation slab in one pass ---------
    h_u = jnp.take(u_feat, src, axis=0).astype(mm_dtype)          # (E, Fu)
    h_v = jnp.take(v_feat, dst, axis=0).astype(mm_dtype)          # (E, Fv)
    x_p = jnp.concatenate([e_feat.astype(mm_dtype), h_u, h_v], axis=1)
    x_p = jnp.pad(x_p, ((0, e_pad - E), (0, k_pad - in_dim)))     # (e_pad, k_pad)

    # Padding must stay zero: padded K-columns of W and padded rows of x are
    # zero and the bias is zero-padded, so the padded output region is
    # bias-only / zero and is sliced away below.  Do not change the fill.
    w_p = jnp.pad(W.astype(mm_dtype), ((0, k_pad - in_dim), (0, c_pad - C)))
    b_p = jnp.pad(b.astype(jnp.float32), (0, c_pad - C)).reshape(1, c_pad)

    # --- VMEM budget from the actual (double-buffered) tile sizes -----------
    w_bytes = k_pad * c_pad * mm_itemsize
    needed = (2 * te * k_pad * mm_itemsize        # x tile, double-buffered
              + 2 * w_bytes                       # weight (worst case 2 bufs)
              + 2 * c_pad * 4                     # bias row
              + 2 * te * c_pad * out_itemsize)    # out tile, double-buffered
    vmem_limit = int(min(64 << 20, max(32 << 20, 2 * needed)))

    # Grid-invariant weight: single-buffer it only when it is large enough to
    # pressure VMEM (v7x: 64 MiB physical); tiny weights keep default pipelining.
    w_spec_kwargs = {}
    if w_bytes >= (8 << 20):
        w_spec_kwargs["pipeline_mode"] = pl.Buffered(1)
    # TODO(synk): if k_pad*c_pad*2B exceeds ~16-24 MiB, also add a K reduction
    # grid axis ("arbitrary", last) with an f32 VMEM accumulator scratch.

    grid = (e_pad // te,)
    cost = pl.CostEstimate(
        flops=2 * e_pad * k_pad * c_pad,
        transcendentals=0,
        bytes_accessed=(e_pad * k_pad * mm_itemsize      # x
                        + w_bytes                        # W
                        + c_pad * 4                      # b
                        + e_pad * c_pad * out_itemsize)) # out (bf16 slab)

    out = pl.pallas_call(
        edge_linear_kernel,
        out_shape=jax.ShapeDtypeStruct((e_pad, c_pad), out_slab_dtype),
        grid_spec=pltpu.PrefetchScalarGridSpec(
            num_scalar_prefetch=0,
            grid=grid,
            in_specs=[
                pl.BlockSpec((te, k_pad), lambda i: (i, 0)),      # edge-feature tile
                pl.BlockSpec((k_pad, c_pad), lambda i: (0, 0),    # fused weight
                             **w_spec_kwargs),
                pl.BlockSpec((1, c_pad), lambda i: (0, 0)),       # bias row (f32)
            ],
            out_specs=pl.BlockSpec((te, c_pad), lambda i: (i, 0)),
        ),
        compiler_params=pltpu.CompilerParams(
            dimension_semantics=("parallel",),
            vmem_limit_bytes=vmem_limit,
            allow_input_fusion=[True, False, False],
        ),
        cost_estimate=cost,
    )(x_p, w_p, b_p)

    # Only the valid (E, C) region is sliced / cast back to f32; the padded
    # bf16 slab is never otherwise touched (cheap: E*C*4 bytes).
    return out[:E, :C].astype(jnp.float32)


if __name__ == "__main__":
    key = jax.random.PRNGKey(0)
    ks = jax.random.split(key, 7)

    # Small synthetic heterograph: Nu 'u' nodes, Nv 'v' nodes, E 'forward' edges.
    N_u, N_v = 64, 48
    Fe, Fu, Fv = 16, 16, 16          # edge / src-node / dst-node feature dims
    C = 8                            # out_dim
    E = 300                          # edges -> e_pad=512, te=256, 2 parallel tiles
    in_dim = Fe + Fu + Fv

    e_feat = jax.random.normal(ks[0], (E, Fe), dtype=jnp.float32)
    u_feat = jax.random.normal(ks[1], (N_u, Fu), dtype=jnp.float32)
    v_feat = jax.random.normal(ks[2], (N_v, Fv), dtype=jnp.float32)
    src = jax.random.randint(ks[3], (E,), 0, N_u, dtype=jnp.int32)
    dst = jax.random.randint(ks[4], (E,), 0, N_v, dtype=jnp.int32)

    # nn.Linear(in_dim, C) parameters, weight stored transposed: W (in_dim, C).
    W = jax.random.normal(ks[5], (in_dim, C), dtype=jnp.float32) / jnp.sqrt(
        jnp.float32(in_dim))
    b = jax.random.normal(ks[6], (C,), dtype=jnp.float32) * 0.01

    score = mlp_edge_scores(src, dst, e_feat, u_feat, v_feat, W, b)
    score = jax.block_until_ready(score)
    assert score.shape == (E, C)
    assert score.dtype == jnp.float32

    # Reference with the same bf16 quantization of the matmul operands.  The
    # kernel additionally rounds the stored slab to bf16, so tolerance covers
    # one bf16 ulp of the result.
    x_full = jnp.concatenate([e_feat, u_feat[src], v_feat[dst]], axis=1)
    xq = x_full.astype(jnp.bfloat16).astype(jnp.float32)
    wq = W.astype(jnp.bfloat16).astype(jnp.float32)
    ref_q = jnp.dot(xq, wq, precision=lax.Precision.HIGHEST) + b[None, :]
    assert jnp.allclose(score, ref_q, atol=2e-2, rtol=2e-2), \
        "mismatch vs bf16-operand reference"

    # Semantic sanity vs full-f32 reference (bf16 operand + output rounding only).
    ref_f32 = jnp.dot(x_full, W, precision=lax.Precision.HIGHEST) + b[None, :]
    assert jnp.max(jnp.abs(score - ref_f32)) < 7e-2, "mismatch vs f32 reference"

    print("KERNEL_OK")
</pallas_src>

<mosaic_0001>
module attributes {stable_mosaic.version = 11 : i64} {
  func.func @edge_linear_kernel(%arg0: i32, %arg1: memref<256x128xbf16, #tpu.memory_space<vmem>>, %arg2: memref<128x128xbf16, #tpu.memory_space<vmem>>, %arg3: memref<1x128xf32, #tpu.memory_space<vmem>>, %arg4: memref<256x128xbf16, #tpu.memory_space<vmem>>) attributes {dimension_semantics = [#tpu.dimension_semantics<parallel>], iteration_bounds = array<i64: 2>, scalar_prefetch = 0 : i64, scratch_operands = 0 : i64, tpu.core_type = #tpu.core_type<tc>, window_params = [{transform_indices = @transform_0, window_bounds = array<i64: 256, 128>}, {pipeline_mode = #tpu.pipeline_mode<synchronous>, transform_indices = @transform_1, window_bounds = array<i64: 128, 128>}, {pipeline_mode = #tpu.pipeline_mode<synchronous>, transform_indices = @transform_2, window_bounds = array<i64: 1, 128>}, {transform_indices = @transform_3, window_bounds = array<i64: 256, 128>}]} {
    %c0 = arith.constant 0 : index
    %c0_0 = arith.constant 0 : index
    %0 = vector.load %arg1[%c0, %c0_0] : memref<256x128xbf16, #tpu.memory_space<vmem>>, vector<256x128xbf16>
    %c0_1 = arith.constant 0 : index
    %c0_2 = arith.constant 0 : index
    %1 = vector.load %arg2[%c0_1, %c0_2] : memref<128x128xbf16, #tpu.memory_space<vmem>>, vector<128x128xbf16>
    %cst = arith.constant dense<0.000000e+00> : vector<256x128xf32>
    %2 = tpu.matmul %0, %1, %cst {dimension_numbers = #tpu.dot_dimension_numbers<[1], [0], [0], [1], [0, 0, 1, 1], [], []>} : vector<256x128xbf16>, vector<128x128xbf16>, vector<256x128xf32> -> vector<256x128xf32>
    %c0_3 = arith.constant 0 : index
    %c0_4 = arith.constant 0 : index
    %3 = vector.load %arg3[%c0_3, %c0_4] : memref<1x128xf32, #tpu.memory_space<vmem>>, vector<1x128xf32>
    %4 = vector.broadcast %3 : vector<1x128xf32> to vector<256x128xf32>
    %5 = arith.addf %2, %4 : vector<256x128xf32>
    %6 = arith.truncf %5 : vector<256x128xf32> to vector<256x128xbf16>
    %c0_5 = arith.constant 0 : index
    %c0_6 = arith.constant 0 : index
    %7 = vector.load %arg4[%c0_5, %c0_6] : memref<256x128xbf16, #tpu.memory_space<vmem>>, vector<256x128xbf16>
    tpu.vector_store %arg4[%c0_5, %c0_6], %6 {strides = array<i32>} : memref<256x128xbf16, #tpu.memory_space<vmem>>, vector<256x128xbf16>,
    return
  }
  func.func @transform_0(%arg0: i32) -> (i32, i32) {
    %c0_i32 = arith.constant 0 : i32
    %c0_i32_0 = arith.constant 0 : i32
    return %arg0, %c0_i32 : i32, i32
  }
  func.func @transform_1(%arg0: i32) -> (i32, i32) {
    %c0_i32 = arith.constant 0 : i32
    %c0_i32_0 = arith.constant 0 : i32
    %c0_i32_1 = arith.constant 0 : i32
    return %c0_i32, %c0_i32_0 : i32, i32
  }
  func.func @transform_2(%arg0: i32) -> (i32, i32) {
    %c0_i32 = arith.constant 0 : i32
    %c0_i32_0 = arith.constant 0 : i32
    %c0_i32_1 = arith.constant 0 : i32
    return %c0_i32, %c0_i32_0 : i32, i32
  }
  func.func @transform_3(%arg0: i32) -> (i32, i32) {
    %c0_i32 = arith.constant 0 : i32
    %c0_i32_0 = arith.constant 0 : i32
    return %arg0, %c0_i32 : i32, i32
  }
}

</mosaic_0001>

<llo_original>
// kernel: mlp_edge_scores.2
$region0: #{mlp_edge_scores.2}
  #allocation0 [shape = 'u32[]', space=smem, size = 0x4, offset = 0x4, fixed_abs, tag = 'smem constant byte address 0x4 - core index']
  #allocation1 [shape = 'u32[144,128]{1,0:T(1,128)}', space=vmem, size = 0x12000, scoped, tag = 'internal scratch']
  #allocation2 [shape = 'u32[2048]{0}', space=vmem, size = 0x2000, scoped, tag = 'scoped memory for mlp_edge_scores.2']
  #allocation3 [shape = 'u32[2048]{0}', space=vmem, size = 0x2000, scoped, tag = 'scoped memory for mlp_edge_scores.2']
  #allocation4 [shape = 'u32[2048]{0}', space=vmem, size = 0x2000, scoped, tag = 'scoped memory for mlp_edge_scores.2']
  #allocation5 [shape = 'u32[2048]{0}', space=vmem, size = 0x2000, scoped, tag = 'scoped memory for mlp_edge_scores.2']
  #allocation6 [shape = 'u32[2048]{0}', space=vmem, size = 0x2000, scoped, tag = 'scoped memory for mlp_edge_scores.2']
  %s0 = inlined_call_operand.vmem [shape: bf16[128,128], index: 0, kind: input, shape index: {}]
  %s1 = inlined_call_operand.vmem [shape: f32[1,128], index: 1, kind: input, shape index: {}]
  %s2 = inlined_call_operand.vmem [shape: bf16[300,48], index: 2, kind: input, shape index: {}]
  %s3 = inlined_call_operand.<no memory space> [shape: bf16[], index: 3, kind: input, shape index: {}]
  %s4 = inlined_call_operand.vmem [shape: bf16[512,128], index: 4, kind: output, shape index: {}]
  %s5 = sld [smem:[#allocation0]]
  $region45: #{mlp_edge_scores.2} parent=0
    _
  %s7 = ssub.s32 1, %s5
  %s8 = scalar_select 0, %s7, %s5
  %v9 = vstv %s3
  %v10 = vunpack.i.l.bf16 %v9
  %v12 = vunpack.i.h.bf16 %v9
  loop: start=0, step=1, limit=4
  $region2: #{mlp_edge_scores.2} parent=0 // loop_pre_header
    _
  $region3: #{mlp_edge_scores.2} parent=0 // loop_header
    %s15 = sphi 0, %s19
    %p16 = scmp.ge.s32.totalorder %s15, 4
    %s25 = sphi 0, %s27
    %s28 = sphi 0, %s25
    %s29 = sphi 0, %s28
    %s45 = sphi 0, %s29
    %s49 = sphi 0, %s49
    %s51 = sphi 0, %s49
    %s52 = sphi 0, %s51
    %s66 = sphi 0, %s52
    %s70 = sphi 0, %s70
    %s72 = sphi 0, %s70
    %s73 = sphi 0, %s72
    %s87 = sphi 0, %s73
    %s93 = sphi 0, %s95
    %s96 = sphi 0, %s93
    %s97 = sphi 0, %s96
    %s113 = sphi 0, %s97
  $region4: #{mlp_edge_scores.2} parent=0 // loop_header_branch
    %18 = sbr.rel (%p16) target = $region8
  $region5: #{mlp_edge_scores.2} parent=0 // loop_body
    %s20 = ssub.s32 %s15, 1
    %s21 = ssub.s32 %s15, 2
    %s22 = sadd.s32 %s15, 1
    %s23 = ssub.s32 %s15, %s22
    %p24 = scmp.eq.s32.totalorder %s23, 0
    %s26 = sadd.s32 %s25, 1
    %s27 = scalar_select %p24, %s25, %s26
    %p30 = pneg %p24
    %p31 = scmp.eq.s32.totalorder %s15, 1
    %p32 = por %p30, %p31
    %p33 = scmp.ne.s32.totalorder %s25, %s28
    %p34 = scmp.eq.s32.totalorder %s15, 0
    %p35 = por %p33, %p34
    %p36 = scmp.ne.s32.totalorder %s25, %s28
    %p37 = scmp.eq.s32.totalorder %s20, 1
    %p38 = por %p36, %p37
    %p39 = scmp.ne.s32.totalorder %s28, %s29
    %p40 = scmp.eq.s32.totalorder %s20, 0
    %p41 = por %p39, %p40
    %p42 = scmp.ne.s32.totalorder %s28, %s29
    %p43 = scmp.eq.s32.totalorder %s21, 1
    %p44 = por %p42, %p43
    %p46 = scmp.ne.s32.totalorder %s29, %s45
    %p47 = scmp.eq.s32.totalorder %s21, 0
    %p48 = por %p46, %p47
    %s50 = sadd.s32 %s49, 1
    %p53 = scmp.eq.s32.totalorder %s15, 1
    %p54 = scmp.ne.s32.totalorder %s49, %s51
    %p55 = scmp.eq.s32.totalorder %s15, 0
    %p56 = por %p54, %p55
    %p57 = scmp.ne.s32.totalorder %s49, %s51
    %p58 = scmp.eq.s32.totalorder %s20, 1
    %p59 = por %p57, %p58
    %p60 = scmp.ne.s32.totalorder %s51, %s52
    %p61 = scmp.eq.s32.totalorder %s20, 0
    %p62 = por %p60, %p61
    %p63 = scmp.ne.s32.totalorder %s51, %s52
    %p64 = scmp.eq.s32.totalorder %s21, 1
    %p65 = por %p63, %p64
    %p67 = scmp.ne.s32.totalorder %s52, %s66
    %p68 = scmp.eq.s32.totalorder %s21, 0
    %p69 = por %p67, %p68
    %s71 = sadd.s32 %s70, 1
    %p74 = scmp.eq.s32.totalorder %s15, 1
    %p75 = scmp.ne.s32.totalorder %s70, %s72
    %p76 = scmp.eq.s32.totalorder %s15, 0
    %p77 = por %p75, %p76
    %p78 = scmp.ne.s32.totalorder %s70, %s72
    %p79 = scmp.eq.s32.totalorder %s20, 1
    %p80 = por %p78, %p79
    %p81 = scmp.ne.s32.totalorder %s72, %s73
    %p82 = scmp.eq.s32.totalorder %s20, 0
    %p83 = por %p81, %p82
    %p84 = scmp.ne.s32.totalorder %s72, %s73
    %p85 = scmp.eq.s32.totalorder %s21, 1
    %p86 = por %p84, %p85
    %p88 = scmp.ne.s32.totalorder %s73, %s87
    %p89 = scmp.eq.s32.totalorder %s21, 0
    %p90 = por %p88, %p89
    %s91 = ssub.s32 %s15, %s22
    %p92 = scmp.eq.s32.totalorder %s91, 0
    %s94 = sadd.s32 %s93, 1
    %s95 = scalar_select %p92, %s93, %s94
    %p98 = pneg %p92
    %p99 = scmp.eq.s32.totalorder %s15, 1
    %p100 = por %p98, %p99
    %p101 = scmp.ne.s32.totalorder %s93, %s96
    %p102 = scmp.eq.s32.totalorder %s15, 0
    %p103 = por %p101, %p102
    %p104 = scmp.ne.s32.totalorder %s93, %s96
    %p105 = scmp.eq.s32.totalorder %s20, 1
    %p106 = por %p104, %p105
    %p107 = scmp.ne.s32.totalorder %s96, %s97
    %p108 = scmp.eq.s32.totalorder %s20, 0
    %p109 = por %p107, %p108
    %p110 = scmp.ne.s32.totalorder %s96, %s97
    %p111 = scmp.eq.s32.totalorder %s21, 1
    %p112 = por %p110, %p111
    %p114 = scmp.ne.s32.totalorder %s97, %s113
    %p115 = scmp.eq.s32.totalorder %s21, 0
    %p116 = por %p114, %p115
    %p117 = scmp.le.s32.totalorder 1, %s15
    %p118 = scmp.lt.s32.totalorder %s15, 3
    %p119 = pnand %p117, %p118
    %p120 = pneg %p119
    // Predicated region
    $region9: #{mlp_edge_scores.2} parent=5 // pred_check
      _
    $region10: #{mlp_edge_scores.2} parent=5 // pred_check_branch
      %122 = sbr.rel (%p119) target = $region12
    $region11: #{mlp_edge_scores.2} parent=5 // pred_region
      %s123 = ssub.s32 %s15, 1
      // Predicated region
      $region13: #{mlp_edge_scores.2} parent=11 // pred_check
        %p124 = pneg %p62
      $region14: #{mlp_edge_scores.2} parent=11 // pred_check_branch
        %126 = sbr.rel (%p124) target = $region16
      $region15: #{mlp_edge_scores.2} parent=11 // pred_region
        _
      $region16: #{mlp_edge_scores.2} parent=11 // pred_fallthru
        _
      // Predicated region
      $region17: #{mlp_edge_scores.2} parent=11 // pred_check
        %p127 = pneg %p83
      $region18: #{mlp_edge_scores.2} parent=11 // pred_check_branch
        %129 = sbr.rel (%p127) target = $region20
      $region19: #{mlp_edge_scores.2} parent=11 // pred_region
        _
      $region20: #{mlp_edge_scores.2} parent=11 // pred_fallthru
        _
    $region12: #{mlp_edge_scores.2} parent=5 // pred_fallthru
      _
    %p130 = scmp.lt.s32.totalorder %s15, 2
    // Predicated region
    $region21: #{mlp_edge_scores.2} parent=5 // pred_check
      %p131 = pneg %p130
    $region22: #{mlp_edge_scores.2} parent=5 // pred_check_branch
      %133 = sbr.rel (%p131) target = $region24
    $region23: #{mlp_edge_scores.2} parent=5 // pred_region
      // Predicated region
      $region25: #{mlp_edge_scores.2} parent=23 // pred_check
        %p134 = pneg %p35
      $region26: #{mlp_edge_scores.2} parent=23 // pred_check_branch
        %136 = sbr.rel (%p134) target = $region28
      $region27: #{mlp_edge_scores.2} parent=23 // pred_region
        %s137 = smul.u32 32, %s15
        %s138 = ssub.s32 38, %s137
        %p139 = scmp.lt.s32.totalorder %s138, 32
        %s140 = scalar_select %p139, %s138, 32
        %s141 = smul.u32 64, %s140
        %p142 = scmp.lt.s32.totalorder %s137, 37
        %s143 = scalar_select %p142, %s137, 37
        %s144 = smul.addr %s143, 4
        %s145 = scalar_lea.vmem %s2, %s144
        %s146 = smul.u32 32, %s15
        %s147 = ssub.s32 38, %s146
        %p148 = scmp.lt.s32.totalorder %s147, 32
        %s149 = scalar_select %p148, %s147, 32
        %s150 = smul.u32 64, %s149
      $region28: #{mlp_edge_scores.2} parent=23 // pred_fallthru
        _
    $region24: #{mlp_edge_scores.2} parent=5 // pred_fallthru
      _
    %p151 = scmp.le.s32.totalorder 1, %s15
    %p152 = scmp.lt.s32.totalorder %s15, 3
    %p153 = pnand %p151, %p152
    %p154 = pneg %p153
    // Predicated region
    $region29: #{mlp_edge_scores.2} parent=5 // pred_check
      _
    $region30: #{mlp_edge_scores.2} parent=5 // pred_check_branch
      %156 = sbr.rel (%p153) target = $region32
    $region31: #{mlp_edge_scores.2} parent=5 // pred_region
      #allocation7 [shape = 'u8[65536]{0}', space=vmem, size = 0x10000, dematerialized = true, scoped, tag = 'FusionAdapter Buffer %fusion.1 = bf16[512,128]{1,0:T(8,128)(2,1)} fusion(%param_2.1, %param_3), kind=kLoop, calls=%fused_computation.3.clone, metadata={op_name="jit(mlp_edge_scores)/jit(_pad)/pad" stack_frame_id=13}']
      %s157 = ssub.s32 %s15, 1
      %s158 = smul.u32 32, %s20
      %s159 = ssub.s32 38, %s158
      %p160 = scmp.lt.s32.totalorder %s159, 32
      %s161 = scalar_select %p160, %s159, 32
      %s162 = smul.u32 64, %s161
      %p163 = scmp.lt.s32.totalorder %s158, 37
      %s164 = scalar_select %p163, %s158, 37
      %s165 = smul.addr %s164, 4
      %s166 = scalar_lea.vmem %s2, %s165
      %p167 = pneg %p41
      %p168 = pneg %p38
      %p169 = pneg %p62
      %p170 = pneg %p59
      %p171 = pneg %p83
      %p172 = pneg %p80
      %p173 = pneg %p109
      %p174 = pneg %p106
      %s175 = smul.u32 32, %s20
      %p176 = scmp.lt.s32.totalorder %s175, 63
      %s177 = scalar_select %p176, %s175, 63
      %s178 = smul.addr %s177, 4
      %s179 = scalar_lea.vmem %s4, %s178
      %s180 = smul.u32 32, %s20
      %s181 = ssub.s32 38, %s180
      %p182 = scmp.lt.s32.totalorder %s181, 32
      %s183 = scalar_select %p182, %s181, 32
      %s184 = smul.u32 64, %s183
      %p185 = scmp.lt.s32.totalorder %s180, 37
      %s186 = scalar_select %p185, %s180, 37
      %s187 = smul.addr %s186, 4
      %s188 = scalar_lea.vmem %s2, %s187
      %s189 = smul.u32 32, %s20
      %s190 = ssub.s32 38, %s189
      %p191 = scmp.lt.s32.totalorder %s190, 32
      %s192 = scalar_select %p191, %s190, 32
      %s193 = smul.u32 64, %s192
      %s194 = smul.u32 32, %s20
      %p195 = scmp.lt.s32.totalorder %s194, 63
      %s196 = scalar_select %p195, %s194, 63
      %s197 = smul.addr %s196, 4
      %s198 = scalar_lea.vmem %s4, %s197
      %s199 = smul.u32 32, %s20
      %s201 = sor.u32 255, 127
      %s202 = sand.u32 %s201, 85
      %s203 = sshrl.u32 %s202, 1
      %s204 = sor.u32 %s202, %s203
      %s205 = sand.u32 51, %s204
      %s206 = sshrl.u32 %s205, 2
      %s207 = sor.u32 %s205, %s206
      %s208 = sand.u32 15, %s207
      %v209 = vld [vmem:[%s188] sm:%s208]
      %v210 = vunpack.c.l.bf16 %v209
      %v211 = vunpack.c.h.bf16 %v209
      %s212 = smul.addr %s189, 8
      %v213 = vlaneseq
      %v214 = vshrl.u32 %v213, 7
      %v215 = vstv %s212
      %v216 = vadd.s32 %v214, %v215
      %vm217 = vcmp.lt.s32.totalorder %v216, 300
      %v218 = vsel %vm217, %v210, %v10
      %v219 = vlaneseq
      %v220 = vand.u32 %v219, 127
      %vm222 = vcmp.lt.s32.totalorder %v220, 48
      %v223 = vsel %vm222, %v218, %v10
      %v224 = vpack.c.bf16 0.0, %v223
      %226 = vst [vmem:[#allocation7] sm:$0xf] %v224
      %s227 = scalar_lea.vmem %s188, 4
      %s229 = sor.u32 255, 127
      %s230 = sand.u32 %s229, 85
      %s231 = sshrl.u32 %s230, 1
      %s232 = sor.u32 %s230, %s231
      %s233 = sand.u32 51, %s232
      %s234 = sshrl.u32 %s233, 2
      %s235 = sor.u32 %s233, %s234
      %s236 = sand.u32 15, %s235
      %v237 = vld [vmem:[%s227] sm:%s236]
      %v238 = vunpack.c.l.bf16 %v237
      %v239 = vunpack.c.h.bf16 %v237
      %s240 = sadd.s32 %s189, 1
      %s241 = smul.addr %s240, 8
      %v242 = vlaneseq
      %v243 = vshrl.u32 %v242, 7
      %v244 = vstv %s241
      %v245 = vadd.s32 %v243, %v244
      %vm246 = vcmp.lt.s32.totalorder %v245, 300
      %v247 = vsel %vm246, %v238, %v10
      %v248 = vlaneseq
      %v249 = vand.u32 %v248, 127
      %vm251 = vcmp.lt.s32.totalorder %v249, 48
      %v252 = vsel %vm251, %v247, %v10
      %s253 = scalar_lea.vmem [#allocation7], 4
      %v254 = vpack.c.bf16 0.0, %v252
      %256 = vst [vmem:[%s253] sm:$0xf] %v254
      %s257 = scalar_lea.vmem %s188, 8
      %s259 = sor.u32 255, 127
      %s260 = sand.u32 %s259, 85
      %s261 = sshrl.u32 %s260, 1
      %s262 = sor.u32 %s260, %s261
      %s263 = sand.u32 51, %s262
      %s264 = sshrl.u32 %s263, 2
      %s265 = sor.u32 %s263, %s264
      %s266 = sand.u32 15, %s265
      %v267 = vld [vmem:[%s257] sm:%s266]
      %v268 = vunpack.c.l.bf16 %v267
      %v269 = vunpack.c.h.bf16 %v267
      %s270 = sadd.s32 %s189, 2
      %s271 = smul.addr %s270, 8
      %v272 = vlaneseq
      %v273 = vshrl.u32 %v272, 7
      %v274 = vstv %s271
      %v275 = vadd.s32 %v273, %v274
      %vm276 = vcmp.lt.s32.totalorder %v275, 300
      %v277 = vsel %vm276, %v268, %v10
      %v278 = vlaneseq
      %v279 = vand.u32 %v278, 127
      %vm281 = vcmp.lt.s32.totalorder %v279, 48
      %v282 = vsel %vm281, %v277, %v10
      %s283 = scalar_lea.vmem [#allocation7], 8
      %v284 = vpack.c.bf16 0.0, %v282
      %286 = vst [vmem:[%s283] sm:$0xf] %v284
      %s287 = scalar_lea.vmem %s188, 12
      %s289 = sor.u32 255, 127
      %s290 = sand.u32 %s289, 85
      %s291 = sshrl.u32 %s290, 1
      %s292 = sor.u32 %s290, %s291
      %s293 = sand.u32 51, %s292
      %s294 = sshrl.u32 %s293, 2
      %s295 = sor.u32 %s293, %s294
      %s296 = sand.u32 15, %s295
      %v297 = vld [vmem:[%s287] sm:%s296]
      %v298 = vunpack.c.l.bf16 %v297
      %v299 = vunpack.c.h.bf16 %v297
      %s300 = sadd.s32 %s189, 3
      %s301 = smul.addr %s300, 8
      %v302 = vlaneseq
      %v303 = vshrl.u32 %v302, 7
      %v304 = vstv %s301
      %v305 = vadd.s32 %v303, %v304
      %vm306 = vcmp.lt.s32.totalorder %v305, 300
      %v307 = vsel %vm306, %v298, %v10
      %v308 = vlaneseq
      %v309 = vand.u32 %v308, 127
      %vm311 = vcmp.lt.s32.totalorder %v309, 48
      %v312 = vsel %vm311, %v307, %v10
      %s313 = scalar_lea.vmem [#allocation7], 12
      %v314 = vpack.c.bf16 0.0, %v312
      %316 = vst [vmem:[%s313] sm:$0xf] %v314
      %s317 = scalar_lea.vmem %s188, 16
      %s319 = sor.u32 255, 127
      %s320 = sand.u32 %s319, 85
      %s321 = sshrl.u32 %s320, 1
      %s322 = sor.u32 %s320, %s321
      %s323 = sand.u32 51, %s322
      %s324 = sshrl.u32 %s323, 2
      %s325 = sor.u32 %s323, %s324
      %s326 = sand.u32 15, %s325
      %v327 = vld [vmem:[%s317] sm:%s326]
      %v328 = vunpack.c.l.bf16 %v327
      %v329 = vunpack.c.h.bf16 %v327
      %s330 = sadd.s32 %s189, 4
      %s331 = smul.addr %s330, 8
      %v332 = vlaneseq
      %v333 = vshrl.u32 %v332, 7
      %v334 = vstv %s331
      %v335 = vadd.s32 %v333, %v334
      %vm336 = vcmp.lt.s32.totalorder %v335, 300
      %v337 = vsel %vm336, %v328, %v10
      %v338 = vlaneseq
      %v339 = vand.u32 %v338, 127
      %vm341 = vcmp.lt.s32.totalorder %v339, 48
      %v342 = vsel %vm341, %v337, %v10
      %s343 = scalar_lea.vmem [#allocation7], 16
      %v344 = vpack.c.bf16 0.0, %v342
      %346 = vst [vmem:[%s343] sm:$0xf] %v344
      %s347 = scalar_lea.vmem %s188, 20
      %s348 = sadd.s32 %s189, 5
      %s349 = ssub.s32 37, %s348
      %p350 = scmp.lt.s32.totalorder %s349, 0
      %s351 = scalar_select %p350, 0, 255
      %s352 = sshrl.u32 %s351, 1
      %s353 = sor.u32 %s351, %s352
      %s354 = sand.u32 %s353, 85
      %s355 = sshrl.u32 %s354, 1
      %s356 = sor.u32 %s354, %s355
      %s357 = sand.u32 51, %s356
      %s358 = sshrl.u32 %s357, 2
      %s359 = sor.u32 %s357, %s358
      %s360 = sand.u32 15, %s359
      %v361 = vld [vmem:[%s347] sm:%s360]
      %v362 = vunpack.c.l.bf16 %v361
      %v363 = vunpack.c.h.bf16 %v361
      %s364 = sadd.s32 %s189, 5
      %s365 = ssub.s32 37, %s364
      %v366 = vstv %s365
      %vm367 = vcmp.lt.s32.totalorder %v366, 0
      %v368 = vsel %vm367, %v10, %v362
      %s369 = sadd.s32 %s189, 5
      %s370 = smul.addr %s369, 8
      %v371 = vlaneseq
      %v372 = vshrl.u32 %v371, 7
      %v373 = vstv %s370
      %v374 = vadd.s32 %v372, %v373
      %vm375 = vcmp.lt.s32.totalorder %v374, 300
      %v376 = vsel %vm375, %v368, %v10
      %v377 = vlaneseq
      %v378 = vand.u32 %v377, 127
      %vm380 = vcmp.lt.s32.totalorder %v378, 48
      %v381 = vsel %vm380, %v376, %v10
      %s382 = scalar_lea.vmem [#allocation7], 20
      %v383 = vpack.c.bf16 0.0, %v381
      %385 = vst [vmem:[%s382] sm:$0xf] %v383
      %s386 = scalar_lea.vmem %s188, 24
      %s387 = sadd.s32 %s189, 6
      %s388 = ssub.s32 37, %s387
      %p389 = scmp.lt.s32.totalorder %s388, 0
      %s390 = scalar_select %p389, 0, 255
      %s391 = sshrl.u32 %s390, 1
      %s392 = sor.u32 %s390, %s391
      %s393 = sand.u32 %s392, 85
      %s394 = sshrl.u32 %s393, 1
      %s395 = sor.u32 %s393, %s394
      %s396 = sand.u32 51, %s395
      %s397 = sshrl.u32 %s396, 2
      %s398 = sor.u32 %s396, %s397
      %s399 = sand.u32 15, %s398
      %v400 = vld [vmem:[%s386] sm:%s399]
      %v401 = vunpack.c.l.bf16 %v400
      %v402 = vunpack.c.h.bf16 %v400
      %s403 = sadd.s32 %s189, 6
      %s404 = ssub.s32 37, %s403
      %v405 = vstv %s404
      %vm406 = vcmp.lt.s32.totalorder %v405, 0
      %v407 = vsel %vm406, %v10, %v401
      %s408 = sadd.s32 %s189, 6
      %s409 = smul.addr %s408, 8
      %v410 = vlaneseq
      %v411 = vshrl.u32 %v410, 7
      %v412 = vstv %s409
      %v413 = vadd.s32 %v411, %v412
      %vm414 = vcmp.lt.s32.totalorder %v413, 300
      %v415 = vsel %vm414, %v407, %v10
      %v416 = vlaneseq
      %v417 = vand.u32 %v416, 127
      %vm419 = vcmp.lt.s32.totalorder %v417, 48
      %v420 = vsel %vm419, %v415, %v10
      %s421 = scalar_lea.vmem [#allocation7], 24
      %v422 = vpack.c.bf16 0.0, %v420
      %424 = vst [vmem:[%s421] sm:$0xf] %v422
      %s425 = scalar_lea.vmem %s188, 28
      %s426 = sadd.s32 %s189, 7
      %s427 = ssub.s32 37, %s426
      %p428 = scmp.lt.s32.totalorder %s427, 0
      %s429 = scalar_select %p428, 0, 255
      %s430 = sshrl.u32 %s429, 1
      %s431 = sor.u32 %s429, %s430
      %s432 = sand.u32 %s431, 85
      %s433 = sshrl.u32 %s432, 1
      %s434 = sor.u32 %s432, %s433
      %s435 = sand.u32 51, %s434
      %s436 = sshrl.u32 %s435, 2
      %s437 = sor.u32 %s435, %s436
      %s438 = sand.u32 15, %s437
      %v439 = vld [vmem:[%s425] sm:%s438]
      %v440 = vunpack.c.l.bf16 %v439
      %v441 = vunpack.c.h.bf16 %v439
      %s442 = sadd.s32 %s189, 7
      %s443 = ssub.s32 37, %s442
      %v444 = vstv %s443
      %vm445 = vcmp.lt.s32.totalorder %v444, 0
      %v446 = vsel %vm445, %v10, %v440
      %s447 = sadd.s32 %s189, 7
      %s448 = smul.addr %s447, 8
      %v449 = vlaneseq
      %v450 = vshrl.u32 %v449, 7
      %v451 = vstv %s448
      %v452 = vadd.s32 %v450, %v451
      %vm453 = vcmp.lt.s32.totalorder %v452, 300
      %v454 = vsel %vm453, %v446, %v10
      %v455 = vlaneseq
      %v456 = vand.u32 %v455, 127
      %vm458 = vcmp.lt.s32.totalorder %v456, 48
      %v459 = vsel %vm458, %v454, %v10
      %s460 = scalar_lea.vmem [#allocation7], 28
      %v461 = vpack.c.bf16 0.0, %v459
      %463 = vst [vmem:[%s460] sm:$0xf] %v461
      %s464 = scalar_lea.vmem %s188, 32
      %s465 = sadd.s32 %s189, 8
      %s466 = ssub.s32 37, %s465
      %p467 = scmp.lt.s32.totalorder %s466, 0
      %s468 = scalar_select %p467, 0, 255
      %s469 = sshrl.u32 %s468, 1
      %s470 = sor.u32 %s468, %s469
      %s471 = sand.u32 %s470, 85
      %s472 = sshrl.u32 %s471, 1
      %s473 = sor.u32 %s471, %s472
      %s474 = sand.u32 51, %s473
      %s475 = sshrl.u32 %s474, 2
      %s476 = sor.u32 %s474, %s475
      %s477 = sand.u32 15, %s476
      %v478 = vld [vmem:[%s464] sm:%s477]
      %v479 = vunpack.c.l.bf16 %v478
      %v480 = vunpack.c.h.bf16 %v478
      %s481 = sadd.s32 %s189, 8
      %s482 = ssub.s32 37, %s481
      %v483 = vstv %s482
      %vm484 = vcmp.lt.s32.totalorder %v483, 0
      %v485 = vsel %vm484, %v10, %v479
      %s486 = sadd.s32 %s189, 8
      %s487 = smul.addr %s486, 8
      %v488 = vlaneseq
      %v489 = vshrl.u32 %v488, 7
      %v490 = vstv %s487
      %v491 = vadd.s32 %v489, %v490
      %vm492 = vcmp.lt.s32.totalorder %v491, 300
      %v493 = vsel %vm492, %v485, %v10
      %v494 = vlaneseq
      %v495 = vand.u32 %v494, 127
      %vm497 = vcmp.lt.s32.totalorder %v495, 48
      %v498 = vsel %vm497, %v493, %v10
      %s499 = scalar_lea.vmem [#allocation7], 32
      %v500 = vpack.c.bf16 0.0, %v498
      %502 = vst [vmem:[%s499] sm:$0xf] %v500
      %s503 = scalar_lea.vmem %s188, 36
      %s504 = sadd.s32 %s189, 9
      %s505 = ssub.s32 37, %s504
      %p506 = scmp.lt.s32.totalorder %s505, 0
      %s507 = scalar_select %p506, 0, 255
      %s508 = sshrl.u32 %s507, 1
      %s509 = sor.u32 %s507, %s508
      %s510 = sand.u32 %s509, 85
      %s511 = sshrl.u32 %s510, 1
      %s512 = sor.u32 %s510, %s511
      %s513 = sand.u32 51, %s512
      %s514 = sshrl.u32 %s513, 2
      %s515 = sor.u32 %s513, %s514
      %s516 = sand.u32 15, %s515
      %v517 = vld [vmem:[%s503] sm:%s516]
      %v518 = vunpack.c.l.bf16 %v517
      %v519 = vunpack.c.h.bf16 %v517
      %s520 = sadd.s32 %s189, 9
      %s521 = ssub.s32 37, %s520
      %v522 = vstv %s521
      %vm523 = vcmp.lt.s32.totalorder %v522, 0
      %v524 = vsel %vm523, %v10, %v518
      %s525 = sadd.s32 %s189, 9
      %s526 = smul.addr %s525, 8
      %v527 = vlaneseq
      %v528 = vshrl.u32 %v527, 7
      %v529 = vstv %s526
      %v530 = vadd.s32 %v528, %v529
      %vm531 = vcmp.lt.s32.totalorder %v530, 300
      %v532 = vsel %vm531, %v524, %v10
      %v533 = vlaneseq
      %v534 = vand.u32 %v533, 127
      %vm536 = vcmp.lt.s32.totalorder %v534, 48
      %v537 = vsel %vm536, %v532, %v10
      %s538 = scalar_lea.vmem [#allocation7], 36
      %v539 = vpack.c.bf16 0.0, %v537
      %541 = vst [vmem:[%s538] sm:$0xf] %v539
      %s542 = scalar_lea.vmem %s188, 40
      %s543 = sadd.s32 %s189, 10
      %s544 = ssub.s32 37, %s543
      %p545 = scmp.lt.s32.totalorder %s544, 0
      %s546 = scalar_select %p545, 0, 255
      %s547 = sshrl.u32 %s546, 1
      %s548 = sor.u32 %s546, %s547
      %s549 = sand.u32 %s548, 85
      %s550 = sshrl.u32 %s549, 1
      %s551 = sor.u32 %s549, %s550
      %s552 = sand.u32 51, %s551
      %s553 = sshrl.u32 %s552, 2
      %s554 = sor.u32 %s552, %s553
      %s555 = sand.u32 15, %s554
      %v556 = vld [vmem:[%s542] sm:%s555]
      %v557 = vunpack.c.l.bf16 %v556
      %v558 = vunpack.c.h.bf16 %v556
      %s559 = sadd.s32 %s189, 10
      %s560 = ssub.s32 37, %s559
      %v561 = vstv %s560
      %vm562 = vcmp.lt.s32.totalorder %v561, 0
      %v563 = vsel %vm562, %v10, %v557
      %s564 = sadd.s32 %s189, 10
      %s565 = smul.addr %s564, 8
      %v566 = vlaneseq
      %v567 = vshrl.u32 %v566, 7
      %v568 = vstv %s565
      %v569 = vadd.s32 %v567, %v568
      %vm570 = vcmp.lt.s32.totalorder %v569, 300
      %v571 = vsel %vm570, %v563, %v10
      %v572 = vlaneseq
      %v573 = vand.u32 %v572, 127
      %vm575 = vcmp.lt.s32.totalorder %v573, 48
      %v576 = vsel %vm575, %v571, %v10
      %s577 = scalar_lea.vmem [#allocation7], 40
      %v578 = vpack.c.bf16 0.0, %v576
      %580 = vst [vmem:[%s577] sm:$0xf] %v578
      %s581 = scalar_lea.vmem %s188, 44
      %s582 = sadd.s32 %s189, 11
      %s583 = ssub.s32 37, %s582
      %p584 = scmp.lt.s32.totalorder %s583, 0
      %s585 = scalar_select %p584, 0, 255
      %s586 = sshrl.u32 %s585, 1
      %s587 = sor.u32 %s585, %s586
      %s588 = sand.u32 %s587, 85
      %s589 = sshrl.u32 %s588, 1
      %s590 = sor.u32 %s588, %s589
      %s591 = sand.u32 51, %s590
      %s592 = sshrl.u32 %s591, 2
      %s593 = sor.u32 %s591, %s592
      %s594 = sand.u32 15, %s593
      %v595 = vld [vmem:[%s581] sm:%s594]
      %v596 = vunpack.c.l.bf16 %v595
      %v597 = vunpack.c.h.bf16 %v595
      %s598 = sadd.s32 %s189, 11
      %s599 = ssub.s32 37, %s598
      %v600 = vstv %s599
      %vm601 = vcmp.lt.s32.totalorder %v600, 0
      %v602 = vsel %vm601, %v10, %v596
      %s603 = sadd.s32 %s189, 11
      %s604 = smul.addr %s603, 8
      %v605 = vlaneseq
      %v606 = vshrl.u32 %v605, 7
      %v607 = vstv %s604
      %v608 = vadd.s32 %v606, %v607
      %vm609 = vcmp.lt.s32.totalorder %v608, 300
      %v610 = vsel %vm609, %v602, %v10
      %v611 = vlaneseq
      %v612 = vand.u32 %v611, 127
      %vm614 = vcmp.lt.s32.totalorder %v612, 48
      %v615 = vsel %vm614, %v610, %v10
      %s616 = scalar_lea.vmem [#allocation7], 44
      %v617 = vpack.c.bf16 0.0, %v615
      %619 = vst [vmem:[%s616] sm:$0xf] %v617
      %s620 = scalar_lea.vmem %s188, 48
      %s621 = sadd.s32 %s189, 12
      %s622 = ssub.s32 37, %s621
      %p623 = scmp.lt.s32.totalorder %s622, 0
      %s624 = scalar_select %p623, 0, 255
      %s625 = sshrl.u32 %s624, 1
      %s626 = sor.u32 %s624, %s625
      %s627 = sand.u32 %s626, 85
      %s628 = sshrl.u32 %s627, 1
      %s629 = sor.u32 %s627, %s628
      %s630 = sand.u32 51, %s629
      %s631 = sshrl.u32 %s630, 2
      %s632 = sor.u32 %s630, %s631
      %s633 = sand.u32 15, %s632
      %v634 = vld [vmem:[%s620] sm:%s633]
      %v635 = vunpack.c.l.bf16 %v634
      %v636 = vunpack.c.h.bf16 %v634
      %s637 = sadd.s32 %s189, 12
      %s638 = ssub.s32 37, %s637
      %v639 = vstv %s638
      %vm640 = vcmp.lt.s32.totalorder %v639, 0
      %v641 = vsel %vm640, %v10, %v635
      %s642 = sadd.s32 %s189, 12
      %s643 = smul.addr %s642, 8
      %v644 = vlaneseq
      %v645 = vshrl.u32 %v644, 7
      %v646 = vstv %s643
      %v647 = vadd.s32 %v645, %v646
      %vm648 = vcmp.lt.s32.totalorder %v647, 300
      %v649 = vsel %vm648, %v641, %v10
      %v650 = vlaneseq
      %v651 = vand.u32 %v650, 127
      %vm653 = vcmp.lt.s32.totalorder %v651, 48
      %v654 = vsel %vm653, %v649, %v10
      %s655 = scalar_lea.vmem [#allocation7], 48
      %v656 = vpack.c.bf16 0.0, %v654
      %658 = vst [vmem:[%s655] sm:$0xf] %v656
      %s659 = scalar_lea.vmem %s188, 52
      %s660 = sadd.s32 %s189, 13
      %s661 = ssub.s32 37, %s660
      %p662 = scmp.lt.s32.totalorder %s661, 0
      %s663 = scalar_select %p662, 0, 255
      %s664 = sshrl.u32 %s663, 1
      %s665 = sor.u32 %s663, %s664
      %s666 = sand.u32 %s665, 85
      %s667 = sshrl.u32 %s666, 1
      %s668 = sor.u32 %s666, %s667
      %s669 = sand.u32 51, %s668
      %s670 = sshrl.u32 %s669, 2
      %s671 = sor.u32 %s669, %s670
      %s672 = sand.u32 15, %s671
      %v673 = vld [vmem:[%s659] sm:%s672]
      %v674 = vunpack.c.l.bf16 %v673
      %v675 = vunpack.c.h.bf16 %v673
      %s676 = sadd.s32 %s189, 13
      %s677 = ssub.s32 37, %s676
      %v678 = vstv %s677
      %vm679 = vcmp.lt.s32.totalorder %v678, 0
      %v680 = vsel %vm679, %v10, %v674
      %s681 = sadd.s32 %s189, 13
      %s682 = smul.addr %s681, 8
      %v683 = vlaneseq
      %v684 = vshrl.u32 %v683, 7
      %v685 = vstv %s682
      %v686 = vadd.s32 %v684, %v685
      %vm687 = vcmp.lt.s32.totalorder %v686, 300
      %v688 = vsel %vm687, %v680, %v10
      %v689 = vlaneseq
      %v690 = vand.u32 %v689, 127
      %vm692 = vcmp.lt.s32.totalorder %v690, 48
      %v693 = vsel %vm692, %v688, %v10
      %s694 = scalar_lea.vmem [#allocation7], 52
      %v695 = vpack.c.bf16 0.0, %v693
      %697 = vst [vmem:[%s694] sm:$0xf] %v695
      %s698 = scalar_lea.vmem %s188, 56
      %s699 = sadd.s32 %s189, 14
      %s700 = ssub.s32 37, %s699
      %p701 = scmp.lt.s32.totalorder %s700, 0
      %s702 = scalar_select %p701, 0, 255
      %s703 = sshrl.u32 %s702, 1
      %s704 = sor.u32 %s702, %s703
      %s705 = sand.u32 %s704, 85
      %s706 = sshrl.u32 %s705, 1
      %s707 = sor.u32 %s705, %s706
      %s708 = sand.u32 51, %s707
      %s709 = sshrl.u32 %s708, 2
      %s710 = sor.u32 %s708, %s709
      %s711 = sand.u32 15, %s710
      %v712 = vld [vmem:[%s698] sm:%s711]
      %v713 = vunpack.c.l.bf16 %v712
      %v714 = vunpack.c.h.bf16 %v712
      %s715 = sadd.s32 %s189, 14
      %s716 = ssub.s32 37, %s715
      %v717 = vstv %s716
      %vm718 = vcmp.lt.s32.totalorder %v717, 0
      %v719 = vsel %vm718, %v10, %v713
      %s720 = sadd.s32 %s189, 14
      %s721 = smul.addr %s720, 8
      %v722 = vlaneseq
      %v723 = vshrl.u32 %v722, 7
      %v724 = vstv %s721
      %v725 = vadd.s32 %v723, %v724
      %vm726 = vcmp.lt.s32.totalorder %v725, 300
      %v727 = vsel %vm726, %v719, %v10
      %v728 = vlaneseq
      %v729 = vand.u32 %v728, 127
      %vm731 = vcmp.lt.s32.totalorder %v729, 48
      %v732 = vsel %vm731, %v727, %v10
      %s733 = scalar_lea.vmem [#allocation7], 56
      %v734 = vpack.c.bf16 0.0, %v732
      %736 = vst [vmem:[%s733] sm:$0xf] %v734
      %s737 = scalar_lea.vmem %s188, 60
      %s738 = sadd.s32 %s189, 15
      %s739 = ssub.s32 37, %s738
      %p740 = scmp.lt.s32.totalorder %s739, 0
      %s741 = scalar_select %p740, 0, 255
      %s742 = sshrl.u32 %s741, 1
      %s743 = sor.u32 %s741, %s742
      %s744 = sand.u32 %s743, 85
      %s745 = sshrl.u32 %s744, 1
      %s746 = sor.u32 %s744, %s745
      %s747 = sand.u32 51, %s746
      %s748 = sshrl.u32 %s747, 2
      %s749 = sor.u32 %s747, %s748
      %s750 = sand.u32 15, %s749
      %v751 = vld [vmem:[%s737] sm:%s750]
      %v752 = vunpack.c.l.bf16 %v751
      %v753 = vunpack.c.h.bf16 %v751
      %s754 = sadd.s32 %s189, 15
      %s755 = ssub.s32 37, %s754
      %v756 = vstv %s755
      %vm757 = vcmp.lt.s32.totalorder %v756, 0
      %v758 = vsel %vm757, %v10, %v752
      %s759 = sadd.s32 %s189, 15
      %s760 = smul.addr %s759, 8
      %v761 = vlaneseq
      %v762 = vshrl.u32 %v761, 7
      %v763 = vstv %s760
      %v764 = vadd.s32 %v762, %v763
      %vm765 = vcmp.lt.s32.totalorder %v764, 300
      %v766 = vsel %vm765, %v758, %v10
      %v767 = vlaneseq
      %v768 = vand.u32 %v767, 127
      %vm770 = vcmp.lt.s32.totalorder %v768, 48
      %v771 = vsel %vm770, %v766, %v10
      %s772 = scalar_lea.vmem [#allocation7], 60
      %v773 = vpack.c.bf16 0.0, %v771
      %775 = vst [vmem:[%s772] sm:$0xf] %v773
      %s776 = scalar_lea.vmem %s188, 64
      %s777 = sadd.s32 %s189, 16
      %s778 = ssub.s32 37, %s777
      %p779 = scmp.lt.s32.totalorder %s778, 0
      %s780 = scalar_select %p779, 0, 255
      %s781 = sshrl.u32 %s780, 1
      %s782 = sor.u32 %s780, %s781
      %s783 = sand.u32 %s782, 85
      %s784 = sshrl.u32 %s783, 1
      %s785 = sor.u32 %s783, %s784
      %s786 = sand.u32 51, %s785
      %s787 = sshrl.u32 %s786, 2
      %s788 = sor.u32 %s786, %s787
      %s789 = sand.u32 15, %s788
      %v790 = vld [vmem:[%s776] sm:%s789]
      %v791 = vunpack.c.l.bf16 %v790
      %v792 = vunpack.c.h.bf16 %v790
      %s793 = sadd.s32 %s189, 16
      %s794 = ssub.s32 37, %s793
      %v795 = vstv %s794
      %vm796 = vcmp.lt.s32.totalorder %v795, 0
      %v797 = vsel %vm796, %v10, %v791
      %s798 = sadd.s32 %s189, 16
      %s799 = smul.addr %s798, 8
      %v800 = vlaneseq
      %v801 = vshrl.u32 %v800, 7
      %v802 = vstv %s799
      %v803 = vadd.s32 %v801, %v802
      %vm804 = vcmp.lt.s32.totalorder %v803, 300
      %v805 = vsel %vm804, %v797, %v10
      %v806 = vlaneseq
      %v807 = vand.u32 %v806, 127
      %vm809 = vcmp.lt.s32.totalorder %v807, 48
      %v810 = vsel %vm809, %v805, %v10
      %s811 = scalar_lea.vmem [#allocation7], 64
      %v812 = vpack.c.bf16 0.0, %v810
      %814 = vst [vmem:[%s811] sm:$0xf] %v812
      %s815 = scalar_lea.vmem %s188, 68
      %s816 = sadd.s32 %s189, 17
      %s817 = ssub.s32 37, %s816
      %p818 = scmp.lt.s32.totalorder %s817, 0
      %s819 = scalar_select %p818, 0, 255
      %s820 = sshrl.u32 %s819, 1
      %s821 = sor.u32 %s819, %s820
      %s822 = sand.u32 %s821, 85
      %s823 = sshrl.u32 %s822, 1
      %s824 = sor.u32 %s822, %s823
      %s825 = sand.u32 51, %s824
      %s826 = sshrl.u32 %s825, 2
      %s827 = sor.u32 %s825, %s826
      %s828 = sand.u32 15, %s827
      %v829 = vld [vmem:[%s815] sm:%s828]
      %v830 = vunpack.c.l.bf16 %v829
      %v831 = vunpack.c.h.bf16 %v829
      %s832 = sadd.s32 %s189, 17
      %s833 = ssub.s32 37, %s832
      %v834 = vstv %s833
      %vm835 = vcmp.lt.s32.totalorder %v834, 0
      %v836 = vsel %vm835, %v10, %v830
      %s837 = sadd.s32 %s189, 17
      %s838 = smul.addr %s837, 8
      %v839 = vlaneseq
      %v840 = vshrl.u32 %v839, 7
      %v841 = vstv %s838
      %v842 = vadd.s32 %v840, %v841
      %vm843 = vcmp.lt.s32.totalorder %v842, 300
      %v844 = vsel %vm843, %v836, %v10
      %v845 = vlaneseq
      %v846 = vand.u32 %v845, 127
      %vm848 = vcmp.lt.s32.totalorder %v846, 48
      %v849 = vsel %vm848, %v844, %v10
      %s850 = scalar_lea.vmem [#allocation7], 68
      %v851 = vpack.c.bf16 0.0, %v849
      %853 = vst [vmem:[%s850] sm:$0xf] %v851
      %s854 = scalar_lea.vmem %s188, 72
      %s855 = sadd.s32 %s189, 18
      %s856 = ssub.s32 37, %s855
      %p857 = scmp.lt.s32.totalorder %s856, 0
      %s858 = scalar_select %p857, 0, 255
      %s859 = sshrl.u32 %s858, 1
      %s860 = sor.u32 %s858, %s859
      %s861 = sand.u32 %s860, 85
      %s862 = sshrl.u32 %s861, 1
      %s863 = sor.u32 %s861, %s862
      %s864 = sand.u32 51, %s863
      %s865 = sshrl.u32 %s864, 2
      %s866 = sor.u32 %s864, %s865
      %s867 = sand.u32 15, %s866
      %v868 = vld [vmem:[%s854] sm:%s867]
      %v869 = vunpack.c.l.bf16 %v868
      %v870 = vunpack.c.h.bf16 %v868
      %s871 = sadd.s32 %s189, 18
      %s872 = ssub.s32 37, %s871
      %v873 = vstv %s872
      %vm874 = vcmp.lt.s32.totalorder %v873, 0
      %v875 = vsel %vm874, %v10, %v869
      %s876 = sadd.s32 %s189, 18
      %s877 = smul.addr %s876, 8
      %v878 = vlaneseq
      %v879 = vshrl.u32 %v878, 7
      %v880 = vstv %s877
      %v881 = vadd.s32 %v879, %v880
      %vm882 = vcmp.lt.s32.totalorder %v881, 300
      %v883 = vsel %vm882, %v875, %v10
      %v884 = vlaneseq
      %v885 = vand.u32 %v884, 127
      %vm887 = vcmp.lt.s32.totalorder %v885, 48
      %v888 = vsel %vm887, %v883, %v10
      %s889 = scalar_lea.vmem [#allocation7], 72
      %v890 = vpack.c.bf16 0.0, %v888
      %892 = vst [vmem:[%s889] sm:$0xf] %v890
      %s893 = scalar_lea.vmem %s188, 76
      %s894 = sadd.s32 %s189, 19
      %s895 = ssub.s32 37, %s894
      %p896 = scmp.lt.s32.totalorder %s895, 0
      %s897 = scalar_select %p896, 0, 255
      %s898 = sshrl.u32 %s897, 1
      %s899 = sor.u32 %s897, %s898
      %s900 = sand.u32 %s899, 85
      %s901 = sshrl.u32 %s900, 1
      %s902 = sor.u32 %s900, %s901
      %s903 = sand.u32 51, %s902
      %s904 = sshrl.u32 %s903, 2
      %s905 = sor.u32 %s903, %s904
      %s906 = sand.u32 15, %s905
      %v907 = vld [vmem:[%s893] sm:%s906]
      %v908 = vunpack.c.l.bf16 %v907
      %v909 = vunpack.c.h.bf16 %v907
      %s910 = sadd.s32 %s189, 19
      %s911 = ssub.s32 37, %s910
      %v912 = vstv %s911
      %vm913 = vcmp.lt.s32.totalorder %v912, 0
      %v914 = vsel %vm913, %v10, %v908
      %s915 = sadd.s32 %s189, 19
      %s916 = smul.addr %s915, 8
      %v917 = vlaneseq
      %v918 = vshrl.u32 %v917, 7
      %v919 = vstv %s916
      %v920 = vadd.s32 %v918, %v919
      %vm921 = vcmp.lt.s32.totalorder %v920, 300
      %v922 = vsel %vm921, %v914, %v10
      %v923 = vlaneseq
      %v924 = vand.u32 %v923, 127
      %vm926 = vcmp.lt.s32.totalorder %v924, 48
      %v927 = vsel %vm926, %v922, %v10
      %s928 = scalar_lea.vmem [#allocation7], 76
      %v929 = vpack.c.bf16 0.0, %v927
      %931 = vst [vmem:[%s928] sm:$0xf] %v929
      %s932 = scalar_lea.vmem %s188, 80
      %s933 = sadd.s32 %s189, 20
      %s934 = ssub.s32 37, %s933
      %p935 = scmp.lt.s32.totalorder %s934, 0
      %s936 = scalar_select %p935, 0, 255
      %s937 = sshrl.u32 %s936, 1
      %s938 = sor.u32 %s936, %s937
      %s939 = sand.u32 %s938, 85
      %s940 = sshrl.u32 %s939, 1
      %s941 = sor.u32 %s939, %s940
      %s942 = sand.u32 51, %s941
      %s943 = sshrl.u32 %s942, 2
      %s944 = sor.u32 %s942, %s943
      %s945 = sand.u32 15, %s944
      %v946 = vld [vmem:[%s932] sm:%s945]
      %v947 = vunpack.c.l.bf16 %v946
      %v948 = vunpack.c.h.bf16 %v946
      %s949 = sadd.s32 %s189, 20
      %s950 = ssub.s32 37, %s949
      %v951 = vstv %s950
      %vm952 = vcmp.lt.s32.totalorder %v951, 0
      %v953 = vsel %vm952, %v10, %v947
      %s954 = sadd.s32 %s189, 20
      %s955 = smul.addr %s954, 8
      %v956 = vlaneseq
      %v957 = vshrl.u32 %v956, 7
      %v958 = vstv %s955
      %v959 = vadd.s32 %v957, %v958
      %vm960 = vcmp.lt.s32.totalorder %v959, 300
      %v961 = vsel %vm960, %v953, %v10
      %v962 = vlaneseq
      %v963 = vand.u32 %v962, 127
      %vm965 = vcmp.lt.s32.totalorder %v963, 48
      %v966 = vsel %vm965, %v961, %v10
      %s967 = scalar_lea.vmem [#allocation7], 80
      %v968 = vpack.c.bf16 0.0, %v966
      %970 = vst [vmem:[%s967] sm:$0xf] %v968
      %s971 = scalar_lea.vmem %s188, 84
      %s972 = sadd.s32 %s189, 21
      %s973 = ssub.s32 37, %s972
      %p974 = scmp.lt.s32.totalorder %s973, 0
      %s975 = scalar_select %p974, 0, 255
      %s976 = sshrl.u32 %s975, 1
      %s977 = sor.u32 %s975, %s976
      %s978 = sand.u32 %s977, 85
      %s979 = sshrl.u32 %s978, 1
      %s980 = sor.u32 %s978, %s979
      %s981 = sand.u32 51, %s980
      %s982 = sshrl.u32 %s981, 2
      %s983 = sor.u32 %s981, %s982
      %s984 = sand.u32 15, %s983
      %v985 = vld [vmem:[%s971] sm:%s984]
      %v986 = vunpack.c.l.bf16 %v985
      %v987 = vunpack.c.h.bf16 %v985
      %s988 = sadd.s32 %s189, 21
      %s989 = ssub.s32 37, %s988
      %v990 = vstv %s989
      %vm991 = vcmp.lt.s32.totalorder %v990, 0
      %v992 = vsel %vm991, %v10, %v986
      %s993 = sadd.s32 %s189, 21
      %s994 = smul.addr %s993, 8
      %v995 = vlaneseq
      %v996 = vshrl.u32 %v995, 7
      %v997 = vstv %s994
      %v998 = vadd.s32 %v996, %v997
      %vm999 = vcmp.lt.s32.totalorder %v998, 300
      %v1000 = vsel %vm999, %v992, %v10
      %v1001 = vlaneseq
      %v1002 = vand.u32 %v1001, 127
      %vm1004 = vcmp.lt.s32.totalorder %v1002, 48
      %v1005 = vsel %vm1004, %v1000, %v10
      %s1006 = scalar_lea.vmem [#allocation7], 84
      %v1007 = vpack.c.bf16 0.0, %v1005
      %1009 = vst [vmem:[%s1006] sm:$0xf] %v1007
      %s1010 = scalar_lea.vmem %s188, 88
      %s1011 = sadd.s32 %s189, 22
      %s1012 = ssub.s32 37, %s1011
      %p1013 = scmp.lt.s32.totalorder %s1012, 0
      %s1014 = scalar_select %p1013, 0, 255
      %s1015 = sshrl.u32 %s1014, 1
      %s1016 = sor.u32 %s1014, %s1015
      %s1017 = sand.u32 %s1016, 85
      %s1018 = sshrl.u32 %s1017, 1
      %s1019 = sor.u32 %s1017, %s1018
      %s1020 = sand.u32 51, %s1019
      %s1021 = sshrl.u32 %s1020, 2
      %s1022 = sor.u32 %s1020, %s1021
      %s1023 = sand.u32 15, %s1022
      %v1024 = vld [vmem:[%s1010] sm:%s1023]
      %v1025 = vunpack.c.l.bf16 %v1024
      %v1026 = vunpack.c.h.bf16 %v1024
      %s1027 = sadd.s32 %s189, 22
      %s1028 = ssub.s32 37, %s1027
      %v1029 = vstv %s1028
      %vm1030 = vcmp.lt.s32.totalorder %v1029, 0
      %v1031 = vsel %vm1030, %v10, %v1025
      %s1032 = sadd.s32 %s189, 22
      %s1033 = smul.addr %s1032, 8
      %v1034 = vlaneseq
      %v1035 = vshrl.u32 %v1034, 7
      %v1036 = vstv %s1033
      %v1037 = vadd.s32 %v1035, %v1036
      %vm1038 = vcmp.lt.s32.totalorder %v1037, 300
      %v1039 = vsel %vm1038, %v1031, %v10
      %v1040 = vlaneseq
      %v1041 = vand.u32 %v1040, 127
      %vm1043 = vcmp.lt.s32.totalorder %v1041, 48
      %v1044 = vsel %vm1043, %v1039, %v10
      %s1045 = scalar_lea.vmem [#allocation7], 88
      %v1046 = vpack.c.bf16 0.0, %v1044
      %1048 = vst [vmem:[%s1045] sm:$0xf] %v1046
      %s1049 = scalar_lea.vmem %s188, 92
      %s1050 = sadd.s32 %s189, 23
      %s1051 = ssub.s32 37, %s1050
      %p1052 = scmp.lt.s32.totalorder %s1051, 0
      %s1053 = scalar_select %p1052, 0, 255
      %s1054 = sshrl.u32 %s1053, 1
      %s1055 = sor.u32 %s1053, %s1054
      %s1056 = sand.u32 %s1055, 85
      %s1057 = sshrl.u32 %s1056, 1
      %s1058 = sor.u32 %s1056, %s1057
      %s1059 = sand.u32 51, %s1058
      %s1060 = sshrl.u32 %s1059, 2
      %s1061 = sor.u32 %s1059, %s1060
      %s1062 = sand.u32 15, %s1061
      %v1063 = vld [vmem:[%s1049] sm:%s1062]
      %v1064 = vunpack.c.l.bf16 %v1063
      %v1065 = vunpack.c.h.bf16 %v1063
      %s1066 = sadd.s32 %s189, 23
      %s1067 = ssub.s32 37, %s1066
      %v1068 = vstv %s1067
      %vm1069 = vcmp.lt.s32.totalorder %v1068, 0
      %v1070 = vsel %vm1069, %v10, %v1064
      %s1071 = sadd.s32 %s189, 23
      %s1072 = smul.addr %s1071, 8
      %v1073 = vlaneseq
      %v1074 = vshrl.u32 %v1073, 7
      %v1075 = vstv %s1072
      %v1076 = vadd.s32 %v1074, %v1075
      %vm1077 = vcmp.lt.s32.totalorder %v1076, 300
      %v1078 = vsel %vm1077, %v1070, %v10
      %v1079 = vlaneseq
      %v1080 = vand.u32 %v1079, 127
      %vm1082 = vcmp.lt.s32.totalorder %v1080, 48
      %v1083 = vsel %vm1082, %v1078, %v10
      %s1084 = scalar_lea.vmem [#allocation7], 92
      %v1085 = vpack.c.bf16 0.0, %v1083
      %1087 = vst [vmem:[%s1084] sm:$0xf] %v1085
      %s1088 = scalar_lea.vmem %s188, 96
      %s1089 = sadd.s32 %s189, 24
      %s1090 = ssub.s32 37, %s1089
      %p1091 = scmp.lt.s32.totalorder %s1090, 0
      %s1092 = scalar_select %p1091, 0, 255
      %s1093 = sshrl.u32 %s1092, 1
      %s1094 = sor.u32 %s1092, %s1093
      %s1095 = sand.u32 %s1094, 85
      %s1096 = sshrl.u32 %s1095, 1
      %s1097 = sor.u32 %s1095, %s1096
      %s1098 = sand.u32 51, %s1097
      %s1099 = sshrl.u32 %s1098, 2
      %s1100 = sor.u32 %s1098, %s1099
      %s1101 = sand.u32 15, %s1100
      %v1102 = vld [vmem:[%s1088] sm:%s1101]
      %v1103 = vunpack.c.l.bf16 %v1102
      %v1104 = vunpack.c.h.bf16 %v1102
      %s1105 = sadd.s32 %s189, 24
      %s1106 = ssub.s32 37, %s1105
      %v1107 = vstv %s1106
      %vm1108 = vcmp.lt.s32.totalorder %v1107, 0
      %v1109 = vsel %vm1108, %v10, %v1103
      %s1110 = sadd.s32 %s189, 24
      %s1111 = smul.addr %s1110, 8
      %v1112 = vlaneseq
      %v1113 = vshrl.u32 %v1112, 7
      %v1114 = vstv %s1111
      %v1115 = vadd.s32 %v1113, %v1114
      %vm1116 = vcmp.lt.s32.totalorder %v1115, 300
      %v1117 = vsel %vm1116, %v1109, %v10
      %v1118 = vlaneseq
      %v1119 = vand.u32 %v1118, 127
      %vm1121 = vcmp.lt.s32.totalorder %v1119, 48
      %v1122 = vsel %vm1121, %v1117, %v10
      %s1123 = scalar_lea.vmem [#allocation7], 96
      %v1124 = vpack.c.bf16 0.0, %v1122
      %1126 = vst [vmem:[%s1123] sm:$0xf] %v1124
      %s1127 = scalar_lea.vmem %s188, 100
      %s1128 = sadd.s32 %s189, 25
      %s1129 = ssub.s32 37, %s1128
      %p1130 = scmp.lt.s32.totalorder %s1129, 0
      %s1131 = scalar_select %p1130, 0, 255
      %s1132 = sshrl.u32 %s1131, 1
      %s1133 = sor.u32 %s1131, %s1132
      %s1134 = sand.u32 %s1133, 85
      %s1135 = sshrl.u32 %s1134, 1
      %s1136 = sor.u32 %s1134, %s1135
      %s1137 = sand.u32 51, %s1136
      %s1138 = sshrl.u32 %s1137, 2
      %s1139 = sor.u32 %s1137, %s1138
      %s1140 = sand.u32 15, %s1139
      %v1141 = vld [vmem:[%s1127] sm:%s1140]
      %v1142 = vunpack.c.l.bf16 %v1141
      %v1143 = vunpack.c.h.bf16 %v1141
      %s1144 = sadd.s32 %s189, 25
      %s1145 = ssub.s32 37, %s1144
      %v1146 = vstv %s1145
      %vm1147 = vcmp.lt.s32.totalorder %v1146, 0
      %v1148 = vsel %vm1147, %v10, %v1142
      %s1149 = sadd.s32 %s189, 25
      %s1150 = smul.addr %s1149, 8
      %v1151 = vlaneseq
      %v1152 = vshrl.u32 %v1151, 7
      %v1153 = vstv %s1150
      %v1154 = vadd.s32 %v1152, %v1153
      %vm1155 = vcmp.lt.s32.totalorder %v1154, 300
      %v1156 = vsel %vm1155, %v1148, %v10
      %v1157 = vlaneseq
      %v1158 = vand.u32 %v1157, 127
      %vm1160 = vcmp.lt.s32.totalorder %v1158, 48
      %v1161 = vsel %vm1160, %v1156, %v10
      %s1162 = scalar_lea.vmem [#allocation7], 100
      %v1163 = vpack.c.bf16 0.0, %v1161
      %1165 = vst [vmem:[%s1162] sm:$0xf] %v1163
      %s1166 = scalar_lea.vmem %s188, 104
      %s1167 = sadd.s32 %s189, 26
      %s1168 = ssub.s32 37, %s1167
      %p1169 = scmp.lt.s32.totalorder %s1168, 0
      %s1170 = scalar_select %p1169, 0, 255
      %s1171 = sshrl.u32 %s1170, 1
      %s1172 = sor.u32 %s1170, %s1171
      %s1173 = sand.u32 %s1172, 85
      %s1174 = sshrl.u32 %s1173, 1
      %s1175 = sor.u32 %s1173, %s1174
      %s1176 = sand.u32 51, %s1175
      %s1177 = sshrl.u32 %s1176, 2
      %s1178 = sor.u32 %s1176, %s1177
      %s1179 = sand.u32 15, %s1178
      %v1180 = vld [vmem:[%s1166] sm:%s1179]
      %v1181 = vunpack.c.l.bf16 %v1180
      %v1182 = vunpack.c.h.bf16 %v1180
      %s1183 = sadd.s32 %s189, 26
      %s1184 = ssub.s32 37, %s1183
      %v1185 = vstv %s1184
      %vm1186 = vcmp.lt.s32.totalorder %v1185, 0
      %v1187 = vsel %vm1186, %v10, %v1181
      %s1188 = sadd.s32 %s189, 26
      %s1189 = smul.addr %s1188, 8
      %v1190 = vlaneseq
      %v1191 = vshrl.u32 %v1190, 7
      %v1192 = vstv %s1189
      %v1193 = vadd.s32 %v1191, %v1192
      %vm1194 = vcmp.lt.s32.totalorder %v1193, 300
      %v1195 = vsel %vm1194, %v1187, %v10
      %v1196 = vlaneseq
      %v1197 = vand.u32 %v1196, 127
      %vm1199 = vcmp.lt.s32.totalorder %v1197, 48
      %v1200 = vsel %vm1199, %v1195, %v10
      %s1201 = scalar_lea.vmem [#allocation7], 104
      %v1202 = vpack.c.bf16 0.0, %v1200
      %1204 = vst [vmem:[%s1201] sm:$0xf] %v1202
      %s1205 = scalar_lea.vmem %s188, 108
      %s1206 = sadd.s32 %s189, 27
      %s1207 = ssub.s32 37, %s1206
      %p1208 = scmp.lt.s32.totalorder %s1207, 0
      %s1209 = scalar_select %p1208, 0, 255
      %s1210 = sshrl.u32 %s1209, 1
      %s1211 = sor.u32 %s1209, %s1210
      %s1212 = sand.u32 %s1211, 85
      %s1213 = sshrl.u32 %s1212, 1
      %s1214 = sor.u32 %s1212, %s1213
      %s1215 = sand.u32 51, %s1214
      %s1216 = sshrl.u32 %s1215, 2
      %s1217 = sor.u32 %s1215, %s1216
      %s1218 = sand.u32 15, %s1217
      %v1219 = vld [vmem:[%s1205] sm:%s1218]
      %v1220 = vunpack.c.l.bf16 %v1219
      %v1221 = vunpack.c.h.bf16 %v1219
      %s1222 = sadd.s32 %s189, 27
      %s1223 = ssub.s32 37, %s1222
      %v1224 = vstv %s1223
      %vm1225 = vcmp.lt.s32.totalorder %v1224, 0
      %v1226 = vsel %vm1225, %v10, %v1220
      %s1227 = sadd.s32 %s189, 27
      %s1228 = smul.addr %s1227, 8
      %v1229 = vlaneseq
      %v1230 = vshrl.u32 %v1229, 7
      %v1231 = vstv %s1228
      %v1232 = vadd.s32 %v1230, %v1231
      %vm1233 = vcmp.lt.s32.totalorder %v1232, 300
      %v1234 = vsel %vm1233, %v1226, %v10
      %v1235 = vlaneseq
      %v1236 = vand.u32 %v1235, 127
      %vm1238 = vcmp.lt.s32.totalorder %v1236, 48
      %v1239 = vsel %vm1238, %v1234, %v10
      %s1240 = scalar_lea.vmem [#allocation7], 108
      %v1241 = vpack.c.bf16 0.0, %v1239
      %1243 = vst [vmem:[%s1240] sm:$0xf] %v1241
      %s1244 = scalar_lea.vmem %s188, 112
      %s1245 = sadd.s32 %s189, 28
      %s1246 = ssub.s32 37, %s1245
      %p1247 = scmp.lt.s32.totalorder %s1246, 0
      %s1248 = scalar_select %p1247, 0, 255
      %s1249 = sshrl.u32 %s1248, 1
      %s1250 = sor.u32 %s1248, %s1249
      %s1251 = sand.u32 %s1250, 85
      %s1252 = sshrl.u32 %s1251, 1
      %s1253 = sor.u32 %s1251, %s1252
      %s1254 = sand.u32 51, %s1253
      %s1255 = sshrl.u32 %s1254, 2
      %s1256 = sor.u32 %s1254, %s1255
      %s1257 = sand.u32 15, %s1256
      %v1258 = vld [vmem:[%s1244] sm:%s1257]
      %v1259 = vunpack.c.l.bf16 %v1258
      %v1260 = vunpack.c.h.bf16 %v1258
      %s1261 = sadd.s32 %s189, 28
      %s1262 = ssub.s32 37, %s1261
      %v1263 = vstv %s1262
      %vm1264 = vcmp.lt.s32.totalorder %v1263, 0
      %v1265 = vsel %vm1264, %v10, %v1259
      %s1266 = sadd.s32 %s189, 28
      %s1267 = smul.addr %s1266, 8
      %v1268 = vlaneseq
      %v1269 = vshrl.u32 %v1268, 7
      %v1270 = vstv %s1267
      %v1271 = vadd.s32 %v1269, %v1270
      %vm1272 = vcmp.lt.s32.totalorder %v1271, 300
      %v1273 = vsel %vm1272, %v1265, %v10
      %v1274 = vlaneseq
      %v1275 = vand.u32 %v1274, 127
      %vm1277 = vcmp.lt.s32.totalorder %v1275, 48
      %v1278 = vsel %vm1277, %v1273, %v10
      %s1279 = scalar_lea.vmem [#allocation7], 112
      %v1280 = vpack.c.bf16 0.0, %v1278
      %1282 = vst [vmem:[%s1279] sm:$0xf] %v1280
      %s1283 = scalar_lea.vmem %s188, 116
      %s1284 = sadd.s32 %s189, 29
      %s1285 = ssub.s32 37, %s1284
      %p1286 = scmp.lt.s32.totalorder %s1285, 0
      %s1287 = scalar_select %p1286, 0, 255
      %s1288 = sshrl.u32 %s1287, 1
      %s1289 = sor.u32 %s1287, %s1288
      %s1290 = sand.u32 %s1289, 85
      %s1291 = sshrl.u32 %s1290, 1
      %s1292 = sor.u32 %s1290, %s1291
      %s1293 = sand.u32 51, %s1292
      %s1294 = sshrl.u32 %s1293, 2
      %s1295 = sor.u32 %s1293, %s1294
      %s1296 = sand.u32 15, %s1295
      %v1297 = vld [vmem:[%s1283] sm:%s1296]
      %v1298 = vunpack.c.l.bf16 %v1297
      %v1299 = vunpack.c.h.bf16 %v1297
      %s1300 = sadd.s32 %s189, 29
      %s1301 = ssub.s32 37, %s1300
      %v1302 = vstv %s1301
      %vm1303 = vcmp.lt.s32.totalorder %v1302, 0
      %v1304 = vsel %vm1303, %v10, %v1298
      %s1305 = sadd.s32 %s189, 29
      %s1306 = smul.addr %s1305, 8
      %v1307 = vlaneseq
      %v1308 = vshrl.u32 %v1307, 7
      %v1309 = vstv %s1306
      %v1310 = vadd.s32 %v1308, %v1309
      %vm1311 = vcmp.lt.s32.totalorder %v1310, 300
      %v1312 = vsel %vm1311, %v1304, %v10
      %v1313 = vlaneseq
      %v1314 = vand.u32 %v1313, 127
      %vm1316 = vcmp.lt.s32.totalorder %v1314, 48
      %v1317 = vsel %vm1316, %v1312, %v10
      %s1318 = scalar_lea.vmem [#allocation7], 116
      %v1319 = vpack.c.bf16 0.0, %v1317
      %1321 = vst [vmem:[%s1318] sm:$0xf] %v1319
      %s1322 = scalar_lea.vmem %s188, 120
      %s1323 = sadd.s32 %s189, 30
      %s1324 = ssub.s32 37, %s1323
      %p1325 = scmp.lt.s32.totalorder %s1324, 0
      %s1326 = scalar_select %p1325, 0, 255
      %s1327 = sshrl.u32 %s1326, 1
      %s1328 = sor.u32 %s1326, %s1327
      %s1329 = sand.u32 %s1328, 85
      %s1330 = sshrl.u32 %s1329, 1
      %s1331 = sor.u32 %s1329, %s1330
      %s1332 = sand.u32 51, %s1331
      %s1333 = sshrl.u32 %s1332, 2
      %s1334 = sor.u32 %s1332, %s1333
      %s1335 = sand.u32 15, %s1334
      %v1336 = vld [vmem:[%s1322] sm:%s1335]
      %v1337 = vunpack.c.l.bf16 %v1336
      %v1338 = vunpack.c.h.bf16 %v1336
      %s1339 = sadd.s32 %s189, 30
      %s1340 = ssub.s32 37, %s1339
      %v1341 = vstv %s1340
      %vm1342 = vcmp.lt.s32.totalorder %v1341, 0
      %v1343 = vsel %vm1342, %v10, %v1337
      %s1344 = sadd.s32 %s189, 30
      %s1345 = smul.addr %s1344, 8
      %v1346 = vlaneseq
      %v1347 = vshrl.u32 %v1346, 7
      %v1348 = vstv %s1345
      %v1349 = vadd.s32 %v1347, %v1348
      %vm1350 = vcmp.lt.s32.totalorder %v1349, 300
      %v1351 = vsel %vm1350, %v1343, %v10
      %v1352 = vlaneseq
      %v1353 = vand.u32 %v1352, 127
      %vm1355 = vcmp.lt.s32.totalorder %v1353, 48
      %v1356 = vsel %vm1355, %v1351, %v10
      %s1357 = scalar_lea.vmem [#allocation7], 120
      %v1358 = vpack.c.bf16 0.0, %v1356
      %1360 = vst [vmem:[%s1357] sm:$0xf] %v1358
      %s1361 = scalar_lea.vmem %s188, 124
      %s1362 = sadd.s32 %s189, 31
      %s1363 = ssub.s32 37, %s1362
      %p1364 = scmp.lt.s32.totalorder %s1363, 0
      %s1365 = scalar_select %p1364, 0, 255
      %s1366 = sshrl.u32 %s1365, 1
      %s1367 = sor.u32 %s1365, %s1366
      %s1368 = sand.u32 %s1367, 85
      %s1369 = sshrl.u32 %s1368, 1
      %s1370 = sor.u32 %s1368, %s1369
      %s1371 = sand.u32 51, %s1370
      %s1372 = sshrl.u32 %s1371, 2
      %s1373 = sor.u32 %s1371, %s1372
      %s1374 = sand.u32 15, %s1373
      %v1375 = vld [vmem:[%s1361] sm:%s1374]
      %v1376 = vunpack.c.l.bf16 %v1375
      %v1377 = vunpack.c.h.bf16 %v1375
      %s1378 = sadd.s32 %s189, 31
      %s1379 = ssub.s32 37, %s1378
      %v1380 = vstv %s1379
      %vm1381 = vcmp.lt.s32.totalorder %v1380, 0
      %v1382 = vsel %vm1381, %v10, %v1376
      %s1383 = sadd.s32 %s189, 31
      %s1384 = smul.addr %s1383, 8
      %v1385 = vlaneseq
      %v1386 = vshrl.u32 %v1385, 7
      %v1387 = vstv %s1384
      %v1388 = vadd.s32 %v1386, %v1387
      %vm1389 = vcmp.lt.s32.totalorder %v1388, 300
      %v1390 = vsel %vm1389, %v1382, %v10
      %v1391 = vlaneseq
      %v1392 = vand.u32 %v1391, 127
      %vm1394 = vcmp.lt.s32.totalorder %v1392, 48
      %v1395 = vsel %vm1394, %v1390, %v10
      %s1396 = scalar_lea.vmem [#allocation7], 124
      %v1397 = vpack.c.bf16 0.0, %v1395
      %1399 = vst [vmem:[%s1396] sm:$0xf] %v1397
      %v1401 = vld [vmem:[#allocation7] sm:$0xf]
      %v1402 = vld [vmem:[#allocation7 + $0x4] sm:$0xf]
      %v1403 = vld [vmem:[#allocation7 + $0x8] sm:$0xf]
      %v1404 = vld [vmem:[#allocation7 + $0xc] sm:$0xf]
      %v1405 = vld [vmem:[#allocation7 + $0x10] sm:$0xf]
      %v1406 = vld [vmem:[#allocation7 + $0x14] sm:$0xf]
      %v1407 = vld [vmem:[#allocation7 + $0x18] sm:$0xf]
      %v1408 = vld [vmem:[#allocation7 + $0x1c] sm:$0xf]
      %v1409 = vld [vmem:[#allocation7 + $0x20] sm:$0xf]
      %v1410 = vld [vmem:[#allocation7 + $0x24] sm:$0xf]
      %v1411 = vld [vmem:[#allocation7 + $0x28] sm:$0xf]
      %v1412 = vld [vmem:[#allocation7 + $0x2c] sm:$0xf]
      %v1413 = vld [vmem:[#allocation7 + $0x30] sm:$0xf]
      %v1414 = vld [vmem:[#allocation7 + $0x34] sm:$0xf]
      %v1415 = vld [vmem:[#allocation7 + $0x38] sm:$0xf]
      %v1416 = vld [vmem:[#allocation7 + $0x3c] sm:$0xf]
      %v1417 = vld [vmem:[#allocation7 + $0x40] sm:$0xf]
      %v1418 = vld [vmem:[#allocation7 + $0x44] sm:$0xf]
      %v1419 = vld [vmem:[#allocation7 + $0x48] sm:$0xf]
      %v1420 = vld [vmem:[#allocation7 + $0x4c] sm:$0xf]
      %v1421 = vld [vmem:[#allocation7 + $0x50] sm:$0xf]
      %v1422 = vld [vmem:[#allocation7 + $0x54] sm:$0xf]
      %v1423 = vld [vmem:[#allocation7 + $0x58] sm:$0xf]
      %v1424 = vld [vmem:[#allocation7 + $0x5c] sm:$0xf]
      %v1425 = vld [vmem:[#allocation7 + $0x60] sm:$0xf]
      %v1426 = vld [vmem:[#allocation7 + $0x64] sm:$0xf]
      %v1427 = vld [vmem:[#allocation7 + $0x68] sm:$0xf]
      %v1428 = vld [vmem:[#allocation7 + $0x6c] sm:$0xf]
      %v1429 = vld [vmem:[#allocation7 + $0x70] sm:$0xf]
      %v1430 = vld [vmem:[#allocation7 + $0x74] sm:$0xf]
      %v1431 = vld [vmem:[#allocation7 + $0x78] sm:$0xf]
      %v1432 = vld [vmem:[#allocation7 + $0x7c] sm:$0xf]
      %v1433 = vld [vmem:[%s0] sm:$0xf]
      %v1434 = vld [vmem:[%s0 + $0x4] sm:$0xf]
      %v1435 = vld [vmem:[%s0 + $0x8] sm:$0xf]
      %v1436 = vld [vmem:[%s0 + $0xc] sm:$0xf]
      %v1437 = vld [vmem:[%s0 + $0x10] sm:$0xf]
      %v1438 = vld [vmem:[%s0 + $0x14] sm:$0xf]
      %v1439 = vld [vmem:[%s0 + $0x18] sm:$0xf]
      %v1440 = vld [vmem:[%s0 + $0x1c] sm:$0xf]
      %v1441 = vld [vmem:[%s0 + $0x20] sm:$0xf]
      %v1442 = vld [vmem:[%s0 + $0x24] sm:$0xf]
      %v1443 = vld [vmem:[%s0 + $0x28] sm:$0xf]
      %v1444 = vld [vmem:[%s0 + $0x2c] sm:$0xf]
      %v1445 = vld [vmem:[%s0 + $0x30] sm:$0xf]
      %v1446 = vld [vmem:[%s0 + $0x34] sm:$0xf]
      %v1447 = vld [vmem:[%s0 + $0x38] sm:$0xf]
      %v1448 = vld [vmem:[%s0 + $0x3c] sm:$0xf]
      %v1449 = vld [vmem:[%s1] sm:$0x1]
      %v1451 = vlaneseq
      %v1452 = vshrl.u32 %v1451, 7
      %v1453 = vsub.s32 0, %v1452
      %v1454 = vrot.slane %v1449, %v1453
      %v1488 = vunpack.c.l.b16 %v1401
      %v1489 = vunpack.c.l.b16 %v1402
      %v1490 = vunpack.c.l.b16 %v1403
      %v1491 = vunpack.c.l.b16 %v1404
      %v1492 = vunpack.c.l.b16 %v1405
      %v1493 = vunpack.c.l.b16 %v1406
      %v1494 = vunpack.c.l.b16 %v1407
      %v1495 = vunpack.c.l.b16 %v1408
      %v1496 = vunpack.c.l.b16 %v1409
      %v1497 = vunpack.c.l.b16 %v1410
      %v1498 = vunpack.c.l.b16 %v1411
      %v1499 = vunpack.c.l.b16 %v1412
      %v1500 = vunpack.c.l.b16 %v1413
      %v1501 = vunpack.c.l.b16 %v1414
      %v1502 = vunpack.c.l.b16 %v1415
      %v1503 = vunpack.c.l.b16 %v1416
      %v1504 = vunpack.c.l.b16 %v1417
      %v1505 = vunpack.c.l.b16 %v1418
      %v1506 = vunpack.c.l.b16 %v1419
      %v1507 = vunpack.c.l.b16 %v1420
      %v1508 = vunpack.c.l.b16 %v1421
      %v1509 = vunpack.c.l.b16 %v1422
      %v1510 = vunpack.c.l.b16 %v1423
      %v1511 = vunpack.c.l.b16 %v1424
      %v1512 = vunpack.c.l.b16 %v1425
      %v1513 = vunpack.c.l.b16 %v1426
      %v1514 = vunpack.c.l.b16 %v1427
      %v1515 = vunpack.c.l.b16 %v1428
      %v1516 = vunpack.c.l.b16 %v1429
      %v1517 = vunpack.c.l.b16 %v1430
      %v1518 = vunpack.c.l.b16 %v1431
      %v1519 = vunpack.c.l.b16 %v1432
      %v1520 = vpack.c.b16 %v1489, %v1488
      %v1521 = vpack.c.b16 %v1491, %v1490
      %v1522 = vpack.c.b16 %v1493, %v1492
      %v1523 = vpack.c.b16 %v1495, %v1494
      %v1524 = vpack.c.b16 %v1497, %v1496
      %v1525 = vpack.c.b16 %v1499, %v1498
      %v1526 = vpack.c.b16 %v1501, %v1500
      %v1527 = vpack.c.b16 %v1503, %v1502
      %v1528 = vpack.c.b16 %v1505, %v1504
      %v1529 = vpack.c.b16 %v1507, %v1506
      %v1530 = vpack.c.b16 %v1509, %v1508
      %v1531 = vpack.c.b16 %v1511, %v1510
      %v1532 = vpack.c.b16 %v1513, %v1512
      %v1533 = vpack.c.b16 %v1515, %v1514
      %v1534 = vpack.c.b16 %v1517, %v1516
      %v1535 = vpack.c.b16 %v1519, %v1518
      %v1568 = vunpack.c.l.b16 %v1433
      %v1569 = vunpack.c.l.b16 %v1434
      %v1570 = vunpack.c.l.b16 %v1435
      %v1571 = vunpack.c.l.b16 %v1436
      %v1572 = vunpack.c.l.b16 %v1437
      %v1573 = vunpack.c.l.b16 %v1438
      %v1574 = vunpack.c.l.b16 %v1439
      %v1575 = vunpack.c.l.b16 %v1440
      %v1576 = vunpack.c.l.b16 %v1441
      %v1577 = vunpack.c.l.b16 %v1442
      %v1578 = vunpack.c.l.b16 %v1443
      %v1579 = vunpack.c.l.b16 %v1444
      %v1580 = vunpack.c.l.b16 %v1445
      %v1581 = vunpack.c.l.b16 %v1446
      %v1582 = vunpack.c.l.b16 %v1447
      %v1583 = vunpack.c.l.b16 %v1448
      %v1584 = vpack.c.b16 %v1569, %v1568
      %v1585 = vpack.c.b16 %v1571, %v1570
      %v1586 = vpack.c.b16 %v1573, %v1572
      %v1587 = vpack.c.b16 %v1575, %v1574
      %v1588 = vpack.c.b16 %v1577, %v1576
      %v1589 = vpack.c.b16 %v1579, %v1578
      %v1590 = vpack.c.b16 %v1581, %v1580
      %v1591 = vpack.c.b16 %v1583, %v1582
      %1600 = vmatprep.subr.bf16.mxu0 0
      %1601 = vmatpush1.bf16.msra.mxu0 %v1584
      %1602 = vmatprep.subr.bf16.mxu0 0
      %1603 = vmatpush1.bf16.msra.mxu0 %v1585
      %1604 = vmatprep.subr.bf16.mxu0 0
      %1605 = vmatpush1.bf16.msra.mxu0 %v1586
      %1606 = vmatprep.subr.bf16.mxu0 0
      %1607 = vmatpush1.bf16.msra.mxu0 %v1587
      %1608 = vmatprep.subr.bf16.mxu0 0
      %1609 = vmatpush1.bf16.msra.mxu0 %v1588
      %1610 = vmatprep.subr.bf16.mxu0 0
      %1611 = vmatpush1.bf16.msra.mxu0 %v1589
      %1612 = vmatprep.subr.bf16.mxu0 0
      %1613 = vmatpush1.bf16.msra.mxu0 %v1590
      %1614 = vmatprep.subr.bf16.mxu0 0
      %1615 = vmatpush1.bf16.msra.mxu0 %v1591
      %1616 = vmatprep.subr.bf16.mxu0 0
      %1617 = vmatpush1.bf16.msra.mxu0 0
      %1618 = vmatprep.subr.bf16.mxu0 0
      %1619 = vmatpush1.bf16.msra.mxu0 0
      %1620 = vmatprep.subr.bf16.mxu0 0
      %1621 = vmatpush1.bf16.msra.mxu0 0
      %1622 = vmatprep.subr.bf16.mxu0 0
      %1623 = vmatpush1.bf16.msra.mxu0 0
      %1624 = vmatprep.subr.bf16.mxu0 0
      %1625 = vmatpush1.bf16.msra.mxu0 0
      %1626 = vmatprep.subr.bf16.mxu0 0
      %1627 = vmatpush1.bf16.msra.mxu0 0
      %1628 = vmatprep.subr.bf16.mxu0 0
      %1629 = vmatpush1.bf16.msra.mxu0 0
      %1630 = vmatprep.subr.bf16.mxu0 0
      %1631 = vmatpush1.bf16.msra.mxu0 0
      %1632 = vmatprep.mubr.bf16.mxu0 0
      %1633 = vmatmul.mubr.bf16.gmra.mrb[0].mxu0 %v1520
      %v1634 = vpop.f32.mrb[0].mxu0
      %v1635 = vadd.f32 %v1454, %v1634
      %v1636 = vpop.f32.mrb[0].mxu0
      %v1637 = vpop.f32.mrb[0].mxu0
      %v1638 = vadd.f32 %v1454, %v1637
      %v1639 = vpop.f32.mrb[0].mxu0
      %1640 = vmatprep.mubr.bf16.mxu0 0
      %1641 = vmatmul.mubr.bf16.gmra.mrb[0].mxu0 %v1521
      %v1642 = vpop.f32.mrb[0].mxu0
      %v1643 = vadd.f32 %v1454, %v1642
      %v1644 = vpop.f32.mrb[0].mxu0
      %v1645 = vpop.f32.mrb[0].mxu0
      %v1646 = vadd.f32 %v1454, %v1645
      %v1647 = vpop.f32.mrb[0].mxu0
      %1648 = vmatprep.mubr.bf16.mxu0 0
      %1649 = vmatmul.mubr.bf16.gmra.mrb[0].mxu0 %v1522
      %v1650 = vpop.f32.mrb[0].mxu0
      %v1651 = vadd.f32 %v1454, %v1650
      %v1652 = vpop.f32.mrb[0].mxu0
      %v1653 = vpop.f32.mrb[0].mxu0
      %v1654 = vadd.f32 %v1454, %v1653
      %v1655 = vpop.f32.mrb[0].mxu0
      %1656 = vmatprep.mubr.bf16.mxu0 0
      %1657 = vmatmul.mubr.bf16.gmra.mrb[0].mxu0 %v1523
      %v1658 = vpop.f32.mrb[0].mxu0
      %v1659 = vadd.f32 %v1454, %v1658
      %v1660 = vpop.f32.mrb[0].mxu0
      %v1661 = vpop.f32.mrb[0].mxu0
      %v1662 = vadd.f32 %v1454, %v1661
      %v1663 = vpop.f32.mrb[0].mxu0
      %1664 = vmatprep.mubr.bf16.mxu0 0
      %1665 = vmatmul.mubr.bf16.gmra.mrb[0].mxu0 %v1524
      %v1666 = vpop.f32.mrb[0].mxu0
      %v1667 = vadd.f32 %v1454, %v1666
      %v1668 = vpop.f32.mrb[0].mxu0
      %v1669 = vpop.f32.mrb[0].mxu0
      %v1670 = vadd.f32 %v1454, %v1669
      %v1671 = vpop.f32.mrb[0].mxu0
      %1672 = vmatprep.mubr.bf16.mxu0 0
      %1673 = vmatmul.mubr.bf16.gmra.mrb[0].mxu0 %v1525
      %v1674 = vpop.f32.mrb[0].mxu0
      %v1675 = vadd.f32 %v1454, %v1674
      %v1676 = vpop.f32.mrb[0].mxu0
      %v1677 = vpop.f32.mrb[0].mxu0
      %v1678 = vadd.f32 %v1454, %v1677
      %v1679 = vpop.f32.mrb[0].mxu0
      %1680 = vmatprep.mubr.bf16.mxu0 0
      %1681 = vmatmul.mubr.bf16.gmra.mrb[0].mxu0 %v1526
      %v1682 = vpop.f32.mrb[0].mxu0
      %v1683 = vadd.f32 %v1454, %v1682
      %v1684 = vpop.f32.mrb[0].mxu0
      %v1685 = vpop.f32.mrb[0].mxu0
      %v1686 = vadd.f32 %v1454, %v1685
      %v1687 = vpop.f32.mrb[0].mxu0
      %1688 = vmatprep.mubr.bf16.mxu0 0
      %1689 = vmatmul.mubr.bf16.gmra.mrb[0].mxu0 %v1527
      %v1690 = vpop.f32.mrb[0].mxu0
      %v1691 = vadd.f32 %v1454, %v1690
      %v1692 = vpop.f32.mrb[0].mxu0
      %v1693 = vpop.f32.mrb[0].mxu0
      %v1694 = vadd.f32 %v1454, %v1693
      %v1695 = vpop.f32.mrb[0].mxu0
      %1696 = vmatprep.mubr.bf16.mxu0 0
      %1697 = vmatmul.mubr.bf16.gmra.mrb[0].mxu0 %v1528
      %v1698 = vpop.f32.mrb[0].mxu0
      %v1699 = vadd.f32 %v1454, %v1698
      %v1700 = vpop.f32.mrb[0].mxu0
      %v1701 = vpop.f32.mrb[0].mxu0
      %v1702 = vadd.f32 %v1454, %v1701
      %v1703 = vpop.f32.mrb[0].mxu0
      %1704 = vmatprep.mubr.bf16.mxu0 0
      %1705 = vmatmul.mubr.bf16.gmra.mrb[0].mxu0 %v1529
      %v1706 = vpop.f32.mrb[0].mxu0
      %v1707 = vadd.f32 %v1454, %v1706
      %v1708 = vpop.f32.mrb[0].mxu0
      %v1709 = vpop.f32.mrb[0].mxu0
      %v1710 = vadd.f32 %v1454, %v1709
      %v1711 = vpop.f32.mrb[0].mxu0
      %1712 = vmatprep.mubr.bf16.mxu0 0
      %1713 = vmatmul.mubr.bf16.gmra.mrb[0].mxu0 %v1530
      %v1714 = vpop.f32.mrb[0].mxu0
      %v1715 = vadd.f32 %v1454, %v1714
      %v1716 = vpop.f32.mrb[0].mxu0
      %v1717 = vpop.f32.mrb[0].mxu0
      %v1718 = vadd.f32 %v1454, %v1717
      %v1719 = vpop.f32.mrb[0].mxu0
      %1720 = vmatprep.mubr.bf16.mxu0 0
      %1721 = vmatmul.mubr.bf16.gmra.mrb[0].mxu0 %v1531
      %v1722 = vpop.f32.mrb[0].mxu0
      %v1723 = vadd.f32 %v1454, %v1722
      %v1724 = vpop.f32.mrb[0].mxu0
      %v1725 = vpop.f32.mrb[0].mxu0
      %v1726 = vadd.f32 %v1454, %v1725
      %v1727 = vpop.f32.mrb[0].mxu0
      %1728 = vmatprep.mubr.bf16.mxu0 0
      %1729 = vmatmul.mubr.bf16.gmra.mrb[0].mxu0 %v1532
      %v1730 = vpop.f32.mrb[0].mxu0
      %v1731 = vadd.f32 %v1454, %v1730
      %v1732 = vpop.f32.mrb[0].mxu0
      %v1733 = vpop.f32.mrb[0].mxu0
      %v1734 = vadd.f32 %v1454, %v1733
      %v1735 = vpop.f32.mrb[0].mxu0
      %1736 = vmatprep.mubr.bf16.mxu0 0
      %1737 = vmatmul.mubr.bf16.gmra.mrb[0].mxu0 %v1533
      %v1738 = vpop.f32.mrb[0].mxu0
      %v1739 = vadd.f32 %v1454, %v1738
      %v1740 = vpop.f32.mrb[0].mxu0
      %v1741 = vpop.f32.mrb[0].mxu0
      %v1742 = vadd.f32 %v1454, %v1741
      %v1743 = vpop.f32.mrb[0].mxu0
      %1744 = vmatprep.mubr.bf16.mxu0 0
      %1745 = vmatmul.mubr.bf16.gmra.mrb[0].mxu0 %v1534
      %v1746 = vpop.f32.mrb[0].mxu0
      %v1747 = vadd.f32 %v1454, %v1746
      %v1748 = vpop.f32.mrb[0].mxu0
      %v1749 = vpop.f32.mrb[0].mxu0
      %v1750 = vadd.f32 %v1454, %v1749
      %v1751 = vpop.f32.mrb[0].mxu0
      %1752 = vmatprep.mubr.bf16.mxu0 0
      %1753 = vmatmul.mubr.bf16.gmra.mrb[0].mxu0 %v1535
      %v1754 = vpop.f32.mrb[0].mxu0
      %v1755 = vadd.f32 %v1454, %v1754
      %v1756 = vpop.f32.mrb[0].mxu0
      %v1757 = vpop.f32.mrb[0].mxu0
      %v1758 = vadd.f32 %v1454, %v1757
      %v1759 = vpop.f32.mrb[0].mxu0
      %1760 = vdwg.mxu0
      %v1761 = vpack.c.bf16 %v1638, %v1635
      %v1762 = vpack.c.bf16 %v1646, %v1643
      %v1763 = vpack.c.bf16 %v1654, %v1651
      %v1764 = vpack.c.bf16 %v1662, %v1659
      %v1765 = vpack.c.bf16 %v1670, %v1667
      %v1766 = vpack.c.bf16 %v1678, %v1675
      %v1767 = vpack.c.bf16 %v1686, %v1683
      %v1768 = vpack.c.bf16 %v1694, %v1691
      %v1769 = vpack.c.bf16 %v1702, %v1699
      %v1770 = vpack.c.bf16 %v1710, %v1707
      %v1771 = vpack.c.bf16 %v1718, %v1715
      %v1772 = vpack.c.bf16 %v1726, %v1723
      %v1773 = vpack.c.bf16 %v1734, %v1731
      %v1774 = vpack.c.bf16 %v1742, %v1739
      %v1775 = vpack.c.bf16 %v1750, %v1747
      %v1776 = vpack.c.bf16 %v1758, %v1755
      %v1793 = vunpack.c.l.b16 %v1761
      %v1794 = vunpack.c.h.b16 %v1761
      %v1795 = vunpack.c.l.b16 %v1762
      %v1796 = vunpack.c.h.b16 %v1762
      %v1797 = vunpack.c.l.b16 %v1763
      %v1798 = vunpack.c.h.b16 %v1763
      %v1799 = vunpack.c.l.b16 %v1764
      %v1800 = vunpack.c.h.b16 %v1764
      %v1801 = vunpack.c.l.b16 %v1765
      %v1802 = vunpack.c.h.b16 %v1765
      %v1803 = vunpack.c.l.b16 %v1766
      %v1804 = vunpack.c.h.b16 %v1766
      %v1805 = vunpack.c.l.b16 %v1767
      %v1806 = vunpack.c.h.b16 %v1767
      %v1807 = vunpack.c.l.b16 %v1768
      %v1808 = vunpack.c.h.b16 %v1768
      %v1809 = vunpack.c.l.b16 %v1769
      %v1810 = vunpack.c.h.b16 %v1769
      %v1811 = vunpack.c.l.b16 %v1770
      %v1812 = vunpack.c.h.b16 %v1770
      %v1813 = vunpack.c.l.b16 %v1771
      %v1814 = vunpack.c.h.b16 %v1771
      %v1815 = vunpack.c.l.b16 %v1772
      %v1816 = vunpack.c.h.b16 %v1772
      %v1817 = vunpack.c.l.b16 %v1773
      %v1818 = vunpack.c.h.b16 %v1773
      %v1819 = vunpack.c.l.b16 %v1774
      %v1820 = vunpack.c.h.b16 %v1774
      %v1821 = vunpack.c.l.b16 %v1775
      %v1822 = vunpack.c.h.b16 %v1775
      %v1823 = vunpack.c.l.b16 %v1776
      %v1824 = vunpack.c.h.b16 %v1776
      %v1825 = vpack.c.b16 %v1793, %v1793
      %v1826 = vpack.c.b16 %v1794, %v1794
      %v1827 = vpack.c.b16 %v1795, %v1795
      %v1828 = vpack.c.b16 %v1796, %v1796
      %v1829 = vpack.c.b16 %v1797, %v1797
      %v1830 = vpack.c.b16 %v1798, %v1798
      %v1831 = vpack.c.b16 %v1799, %v1799
      %v1832 = vpack.c.b16 %v1800, %v1800
      %v1833 = vpack.c.b16 %v1801, %v1801
      %v1834 = vpack.c.b16 %v1802, %v1802
      %v1835 = vpack.c.b16 %v1803, %v1803
      %v1836 = vpack.c.b16 %v1804, %v1804
      %v1837 = vpack.c.b16 %v1805, %v1805
      %v1838 = vpack.c.b16 %v1806, %v1806
      %v1839 = vpack.c.b16 %v1807, %v1807
      %v1840 = vpack.c.b16 %v1808, %v1808
      %v1841 = vpack.c.b16 %v1809, %v1809
      %v1842 = vpack.c.b16 %v1810, %v1810
      %v1843 = vpack.c.b16 %v1811, %v1811
      %v1844 = vpack.c.b16 %v1812, %v1812
      %v1845 = vpack.c.b16 %v1813, %v1813
      %v1846 = vpack.c.b16 %v1814, %v1814
      %v1847 = vpack.c.b16 %v1815, %v1815
      %v1848 = vpack.c.b16 %v1816, %v1816
      %v1849 = vpack.c.b16 %v1817, %v1817
      %v1850 = vpack.c.b16 %v1818, %v1818
      %v1851 = vpack.c.b16 %v1819, %v1819
      %v1852 = vpack.c.b16 %v1820, %v1820
      %v1853 = vpack.c.b16 %v1821, %v1821
      %v1854 = vpack.c.b16 %v1822, %v1822
      %v1855 = vpack.c.b16 %v1823, %v1823
      %v1856 = vpack.c.b16 %v1824, %v1824
      %1889 = vst [vmem:[%s198] sm:$0xf] %v1825
      %1890 = vst [vmem:[%s198 + $0x4] sm:$0xf] %v1826
      %1891 = vst [vmem:[%s198 + $0x8] sm:$0xf] %v1827
      %1892 = vst [vmem:[%s198 + $0xc] sm:$0xf] %v1828
      %1893 = vst [vmem:[%s198 + $0x10] sm:$0xf] %v1829
      %1894 = vst [vmem:[%s198 + $0x14] sm:$0xf] %v1830
      %1895 = vst [vmem:[%s198 + $0x18] sm:$0xf] %v1831
      %1896 = vst [vmem:[%s198 + $0x1c] sm:$0xf] %v1832
      %1897 = vst [vmem:[%s198 + $0x20] sm:$0xf] %v1833
      %1898 = vst [vmem:[%s198 + $0x24] sm:$0xf] %v1834
      %1899 = vst [vmem:[%s198 + $0x28] sm:$0xf] %v1835
      %1900 = vst [vmem:[%s198 + $0x2c] sm:$0xf] %v1836
      %1901 = vst [vmem:[%s198 + $0x30] sm:$0xf] %v1837
      %1902 = vst [vmem:[%s198 + $0x34] sm:$0xf] %v1838
      %1903 = vst [vmem:[%s198 + $0x38] sm:$0xf] %v1839
      %1904 = vst [vmem:[%s198 + $0x3c] sm:$0xf] %v1840
      %1905 = vst [vmem:[%s198 + $0x40] sm:$0xf] %v1841
      %1906 = vst [vmem:[%s198 + $0x44] sm:$0xf] %v1842
      %1907 = vst [vmem:[%s198 + $0x48] sm:$0xf] %v1843
      %1908 = vst [vmem:[%s198 + $0x4c] sm:$0xf] %v1844
      %1909 = vst [vmem:[%s198 + $0x50] sm:$0xf] %v1845
      %1910 = vst [vmem:[%s198 + $0x54] sm:$0xf] %v1846
      %1911 = vst [vmem:[%s198 + $0x58] sm:$0xf] %v1847
      %1912 = vst [vmem:[%s198 + $0x5c] sm:$0xf] %v1848
      %1913 = vst [vmem:[%s198 + $0x60] sm:$0xf] %v1849
      %1914 = vst [vmem:[%s198 + $0x64] sm:$0xf] %v1850
      %1915 = vst [vmem:[%s198 + $0x68] sm:$0xf] %v1851
      %1916 = vst [vmem:[%s198 + $0x6c] sm:$0xf] %v1852
      %1917 = vst [vmem:[%s198 + $0x70] sm:$0xf] %v1853
      %1918 = vst [vmem:[%s198 + $0x74] sm:$0xf] %v1854
      %1919 = vst [vmem:[%s198 + $0x78] sm:$0xf] %v1855
      %1920 = vst [vmem:[%s198 + $0x7c] sm:$0xf] %v1856
      %s1921 = smul.u32 32, %s20
      %p1922 = scmp.lt.s32.totalorder %s1921, 63
      %s1923 = scalar_select %p1922, %s1921, 63
      %s1924 = smul.addr %s1923, 4
      %s1925 = scalar_lea.vmem %s4, %s1924
      // Predicated region
      $region33: #{mlp_edge_scores.2} parent=31 // pred_check
        %p1926 = pneg %p106
      $region34: #{mlp_edge_scores.2} parent=31 // pred_check_branch
        %1928 = sbr.rel (%p1926) target = $region36
      $region35: #{mlp_edge_scores.2} parent=31 // pred_region
        %s1929 = smul.u32 32, %s20
      $region36: #{mlp_edge_scores.2} parent=31 // pred_fallthru
        _
    $region32: #{mlp_edge_scores.2} parent=5 // pred_fallthru
      _
    %p1930 = scmp.le.s32.totalorder 2, %s15
    // Predicated region
    $region37: #{mlp_edge_scores.2} parent=5 // pred_check
      %p1931 = pneg %p1930
    $region38: #{mlp_edge_scores.2} parent=5 // pred_check_branch
      %1933 = sbr.rel (%p1931) target = $region40
    $region39: #{mlp_edge_scores.2} parent=5 // pred_region
      %s1934 = ssub.s32 %s15, 2
      // Predicated region
      $region41: #{mlp_edge_scores.2} parent=39 // pred_check
        %p1935 = pneg %p112
      $region42: #{mlp_edge_scores.2} parent=39 // pred_check_branch
        %1937 = sbr.rel (%p1935) target = $region44
      $region43: #{mlp_edge_scores.2} parent=39 // pred_region
        %s1938 = smul.u32 32, %s21
        %p1939 = scmp.lt.s32.totalorder %s1938, 63
        %s1940 = scalar_select %p1939, %s1938, 63
        %s1941 = smul.addr %s1940, 4
        %s1942 = scalar_lea.vmem %s4, %s1941
      $region44: #{mlp_edge_scores.2} parent=39 // pred_fallthru
        _
    $region40: #{mlp_edge_scores.2} parent=5 // pred_fallthru
      _
  $region6: #{mlp_edge_scores.2} parent=0 // loop_footer
    %s19 = sadd.s32 1, %s15
  $region7: #{mlp_edge_scores.2} parent=0 // loop_footer_branch
    %14 = sbr.rel target = $region3
  $region8: #{mlp_edge_scores.2} parent=0 // loop_exit
    _

</llo_original>
